<compile_context>
chip_gen: v5e
topology: v5e:2x2
jax: 0.10.0
libtpu: 0.0.40
codegen_flags: <defaults>
</compile_context>

<pallas_src>
import jax
import jax.numpy as jnp
from jax import lax
from jax.experimental import pallas as pl
from jax.experimental.pallas import tpu as pltpu

LANE = 128
VMEM = pl.BlockSpec(memory_space=pltpu.MemorySpace.VMEM)


def _round_up(x, m):
    return (x + m - 1) // m * m


# ---------------------------------------------------------------------------
# Fully fused kernel:
#   A_hat = count(non-self-loop edges) + (1+eps) * I         (built in VMEM)
#   h     = GIN_layer^3(x)        (agg = A_hat @ h ; MLP = Lin,ReLU,Lin,ReLU)
#   out   = FFN(mean_pool(h))     (Lin, ReLU, Dropout=id, Lin)
# ---------------------------------------------------------------------------
def _make_fused_kernel(num_nodes, n_pad, e_pad, eps):
    def kernel(src_ref, tgt_ref, x_ref,
               w11_ref, b11_ref, w12_ref, b12_ref,
               w21_ref, b21_ref, w22_ref, b22_ref,
               w31_ref, b31_ref, w32_ref, b32_ref,
               wf1_ref, bf1_ref, wf2_ref, bf2_ref,
               o_ref):
        # ---- build A_hat via one-hot MXU matmul (no XLA scatter) ----------
        src = src_ref[...]                                    # (1, E_pad) int32
        tgt = tgt_ref[...]                                    # (1, E_pad) int32
        node_ids = lax.broadcasted_iota(jnp.int32, (n_pad, e_pad), 0)
        not_self = src != tgt                                 # padded edges: src = tgt = -1
        t_oh = jnp.where((node_ids == tgt) & not_self,
                         1.0, 0.0).astype(jnp.bfloat16)       # T[n, e] = [tgt[e] == n]
        s_oh = jnp.where(node_ids == src,
                         1.0, 0.0).astype(jnp.bfloat16)       # S[n, e] = [src[e] == n]
        # A[t, s] = #edges (s -> t), self loops removed; contract the edge axis.
        a = lax.dot_general(t_oh, s_oh, (((1,), (1,)), ((), ())),
                            preferred_element_type=jnp.float32)
        rows = lax.broadcasted_iota(jnp.int32, (n_pad, n_pad), 0)
        cols = lax.broadcasted_iota(jnp.int32, (n_pad, n_pad), 1)
        diag = jnp.where((rows == cols) & (rows < num_nodes), 1.0 + eps, 0.0)
        a_bf = (a + diag).astype(jnp.bfloat16)                # exact small integers

        def gin_layer(h_bf, w1_ref, b1_ref, w2_ref, b2_ref):
            agg = jnp.dot(a_bf, h_bf, preferred_element_type=jnp.float32)
            z1 = jnp.dot(agg.astype(jnp.bfloat16), w1_ref[...],
                         preferred_element_type=jnp.float32) + b1_ref[...]
            z1 = jnp.maximum(z1, 0.0)
            z2 = jnp.dot(z1.astype(jnp.bfloat16), w2_ref[...],
                         preferred_element_type=jnp.float32) + b2_ref[...]
            return jnp.maximum(z2, 0.0).astype(jnp.bfloat16)

        h = gin_layer(x_ref[...].astype(jnp.bfloat16),
                      w11_ref, b11_ref, w12_ref, b12_ref)      # conv1
        h = gin_layer(h, w21_ref, b21_ref, w22_ref, b22_ref)   # convs[0]
        h = gin_layer(h, w31_ref, b31_ref, w32_ref, b32_ref)   # convs[1]

        # ---- GlobalMeanPool (batch = zeros -> single graph); mask padded rows
        row_valid = lax.broadcasted_iota(jnp.int32, (n_pad, 1), 0) < num_nodes
        pooled = jnp.sum(jnp.where(row_valid, h.astype(jnp.float32), 0.0),
                         axis=0, keepdims=True) * (1.0 / num_nodes)   # (1, H_pad)

        # ---- FFN head: Linear, ReLU, Dropout(identity), Linear -------------
        z = jnp.dot(pooled.astype(jnp.bfloat16), wf1_ref[...],
                    preferred_element_type=jnp.float32) + bf1_ref[...]
        z = jnp.maximum(z, 0.0)
        # TODO(synk): nn.Dropout treated as identity (eval-mode semantics).
        o_ref[...] = jnp.dot(z.astype(jnp.bfloat16), wf2_ref[...],
                             preferred_element_type=jnp.float32) + bf2_ref[...]

    return kernel


# ---------------------------------------------------------------------------
# Wrapper: pad everything to lane-dense shapes, cast weights to bf16, call once.
# ---------------------------------------------------------------------------
def gin_3l_forward(x, edge_index, params, eps=0.0):
    n, d = x.shape
    e = edge_index.shape[1]
    hdim = params["w1_2"].shape[1]
    ncls = params["wf_2"].shape[1]

    n_pad = _round_up(n, LANE)      # N appears on the lane axis of A_hat
    e_pad = _round_up(e, LANE)
    d_pad = _round_up(d, LANE)
    h_pad = _round_up(hdim, LANE)
    c_pad = _round_up(ncls, LANE)

    def pad2(a, r, c, dtype):
        return jnp.pad(a, ((0, r - a.shape[0]), (0, c - a.shape[1]))).astype(dtype)

    src = jnp.pad(edge_index[0].astype(jnp.int32), (0, e_pad - e),
                  constant_values=-1).reshape(1, e_pad)
    tgt = jnp.pad(edge_index[1].astype(jnp.int32), (0, e_pad - e),
                  constant_values=-1).reshape(1, e_pad)
    xp = pad2(x, n_pad, d_pad, jnp.float32)

    bf, f32 = jnp.bfloat16, jnp.float32
    args = [
        src, tgt, xp,
        pad2(params["w1_1"], d_pad, h_pad, bf), pad2(params["b1_1"], 1, h_pad, f32),
        pad2(params["w1_2"], h_pad, h_pad, bf), pad2(params["b1_2"], 1, h_pad, f32),
        pad2(params["w2_1"], h_pad, h_pad, bf), pad2(params["b2_1"], 1, h_pad, f32),
        pad2(params["w2_2"], h_pad, h_pad, bf), pad2(params["b2_2"], 1, h_pad, f32),
        pad2(params["w3_1"], h_pad, h_pad, bf), pad2(params["b3_1"], 1, h_pad, f32),
        pad2(params["w3_2"], h_pad, h_pad, bf), pad2(params["b3_2"], 1, h_pad, f32),
        pad2(params["wf_1"], h_pad, h_pad, bf), pad2(params["bf_1"], 1, h_pad, f32),
        pad2(params["wf_2"], h_pad, c_pad, bf), pad2(params["bf_2"], 1, c_pad, f32),
    ]

    kernel = _make_fused_kernel(n, n_pad, e_pad, float(eps))
    out_pad = pl.pallas_call(
        kernel,
        out_shape=jax.ShapeDtypeStruct((1, c_pad), jnp.float32),
        in_specs=[VMEM] * len(args),
        out_specs=VMEM,
    )(*args)
    return out_pad[:, :ncls]


def init_params(key, dim_node, dim_hidden, num_classes):
    keys = jax.random.split(key, 16)
    s = 0.1

    def lin(kw, kb, din, dout):
        w = (s * jax.random.normal(kw, (din, dout))).astype(jnp.float32)
        b = (s * jax.random.normal(kb, (1, dout))).astype(jnp.float32)
        return w, b

    p = {}
    p["w1_1"], p["b1_1"] = lin(keys[0], keys[1], dim_node, dim_hidden)    # conv1 MLP
    p["w1_2"], p["b1_2"] = lin(keys[2], keys[3], dim_hidden, dim_hidden)
    p["w2_1"], p["b2_1"] = lin(keys[4], keys[5], dim_hidden, dim_hidden)  # convs[0]
    p["w2_2"], p["b2_2"] = lin(keys[6], keys[7], dim_hidden, dim_hidden)
    p["w3_1"], p["b3_1"] = lin(keys[8], keys[9], dim_hidden, dim_hidden)  # convs[1]
    p["w3_2"], p["b3_2"] = lin(keys[10], keys[11], dim_hidden, dim_hidden)
    p["wf_1"], p["bf_1"] = lin(keys[12], keys[13], dim_hidden, dim_hidden)  # ffn
    p["wf_2"], p["bf_2"] = lin(keys[14], keys[15], dim_hidden, num_classes)
    return p


if __name__ == "__main__":
    N = 16           # number of nodes
    DIM_NODE = 8     # data_args.dim_node
    DIM_HIDDEN = 32  # data_args.dim_hidden
    NUM_CLASSES = 4  # data_args.num_classes

    key = jax.random.PRNGKey(0)
    kx, kp = jax.random.split(key)

    x = jax.random.normal(kx, (N, DIM_NODE), dtype=jnp.float32)

    # simple undirected ring graph: i <-> (i+1) mod N  (no self loops)
    s = jnp.arange(N, dtype=jnp.int32)
    t = (s + 1) % N
    edge_index = jnp.stack(
        [jnp.concatenate([s, t]), jnp.concatenate([t, s])], axis=0
    )  # [2, 2N]

    params = init_params(kp, DIM_NODE, DIM_HIDDEN, NUM_CLASSES)

    fwd = jax.jit(gin_3l_forward)
    out = fwd(x, edge_index, params)
    jax.block_until_ready(out)

    assert out.shape == (1, NUM_CLASSES)
    assert bool(jnp.all(jnp.isfinite(out)))
    print("KERNEL_OK")
</pallas_src>

<mosaic_0001>
module attributes {stable_mosaic.version = 11 : i64} {
  func.func @kernel(%arg0: memref<1x128xi32, #tpu.memory_space<vmem>>, %arg1: memref<1x128xi32, #tpu.memory_space<vmem>>, %arg2: memref<128x128xf32, #tpu.memory_space<vmem>>, %arg3: memref<128x128xbf16, #tpu.memory_space<vmem>>, %arg4: memref<1x128xf32, #tpu.memory_space<vmem>>, %arg5: memref<128x128xbf16, #tpu.memory_space<vmem>>, %arg6: memref<1x128xf32, #tpu.memory_space<vmem>>, %arg7: memref<128x128xbf16, #tpu.memory_space<vmem>>, %arg8: memref<1x128xf32, #tpu.memory_space<vmem>>, %arg9: memref<128x128xbf16, #tpu.memory_space<vmem>>, %arg10: memref<1x128xf32, #tpu.memory_space<vmem>>, %arg11: memref<128x128xbf16, #tpu.memory_space<vmem>>, %arg12: memref<1x128xf32, #tpu.memory_space<vmem>>, %arg13: memref<128x128xbf16, #tpu.memory_space<vmem>>, %arg14: memref<1x128xf32, #tpu.memory_space<vmem>>, %arg15: memref<128x128xbf16, #tpu.memory_space<vmem>>, %arg16: memref<1x128xf32, #tpu.memory_space<vmem>>, %arg17: memref<128x128xbf16, #tpu.memory_space<vmem>>, %arg18: memref<1x128xf32, #tpu.memory_space<vmem>>, %arg19: memref<1x128xf32, #tpu.memory_space<vmem>>) attributes {dimension_semantics = [], scalar_prefetch = 0 : i64, scratch_operands = 0 : i64, tpu.core_type = #tpu.core_type<tc>} {
    %c0 = arith.constant 0 : index
    %c0_0 = arith.constant 0 : index
    %0 = vector.load %arg0[%c0, %c0_0] : memref<1x128xi32, #tpu.memory_space<vmem>>, vector<1x128xi32>
    %c0_1 = arith.constant 0 : index
    %c0_2 = arith.constant 0 : index
    %1 = vector.load %arg1[%c0_1, %c0_2] : memref<1x128xi32, #tpu.memory_space<vmem>>, vector<1x128xi32>
    %2 = tpu.iota {dimensions = array<i32: 0>} : vector<128x128xi32>
    %3 = arith.cmpi ne, %0, %1 : vector<1x128xi32>
    %4 = vector.broadcast %1 : vector<1x128xi32> to vector<128x128xi32>
    %5 = arith.cmpi eq, %2, %4 : vector<128x128xi32>
    %6 = vector.broadcast %3 : vector<1x128xi1> to vector<128x128xi1>
    %7 = arith.andi %5, %6 : vector<128x128xi1>
    %cst = arith.constant 1.000000e+00 : f32
    %cst_3 = arith.constant 0.000000e+00 : f32
    %8 = vector.broadcast %cst : f32 to vector<128x128xf32>
    %9 = vector.broadcast %cst_3 : f32 to vector<128x128xf32>
    %10 = arith.select %7, %8, %9 : vector<128x128xi1>, vector<128x128xf32>
    %11 = arith.truncf %10 : vector<128x128xf32> to vector<128x128xbf16>
    %12 = vector.broadcast %0 : vector<1x128xi32> to vector<128x128xi32>
    %13 = arith.cmpi eq, %2, %12 : vector<128x128xi32>
    %cst_4 = arith.constant 1.000000e+00 : f32
    %cst_5 = arith.constant 0.000000e+00 : f32
    %14 = vector.broadcast %cst_4 : f32 to vector<128x128xf32>
    %15 = vector.broadcast %cst_5 : f32 to vector<128x128xf32>
    %16 = arith.select %13, %14, %15 : vector<128x128xi1>, vector<128x128xf32>
    %17 = arith.truncf %16 : vector<128x128xf32> to vector<128x128xbf16>
    %cst_6 = arith.constant dense<0.000000e+00> : vector<128x128xf32>
    %18 = tpu.matmul %11, %17, %cst_6 {dimension_numbers = #tpu.dot_dimension_numbers<[1], [1], [0], [0], [0, 0, 1, 0], [], []>} : vector<128x128xbf16>, vector<128x128xbf16>, vector<128x128xf32> -> vector<128x128xf32>
    %19 = tpu.iota {dimensions = array<i32: 0>} : vector<128x128xi32>
    %20 = tpu.iota {dimensions = array<i32: 1>} : vector<128x128xi32>
    %21 = arith.cmpi eq, %19, %20 : vector<128x128xi32>
    %c16_i32 = arith.constant 16 : i32
    %22 = vector.broadcast %c16_i32 : i32 to vector<128x128xi32>
    %23 = arith.cmpi slt, %19, %22 : vector<128x128xi32>
    %24 = arith.andi %21, %23 : vector<128x128xi1>
    %cst_7 = arith.constant 1.000000e+00 : f32
    %cst_8 = arith.constant 0.000000e+00 : f32
    %25 = vector.broadcast %cst_7 : f32 to vector<128x128xf32>
    %26 = vector.broadcast %cst_8 : f32 to vector<128x128xf32>
    %27 = arith.select %24, %25, %26 : vector<128x128xi1>, vector<128x128xf32>
    %28 = arith.addf %18, %27 : vector<128x128xf32>
    %29 = arith.truncf %28 : vector<128x128xf32> to vector<128x128xbf16>
    %c0_9 = arith.constant 0 : index
    %c0_10 = arith.constant 0 : index
    %30 = vector.load %arg2[%c0_9, %c0_10] : memref<128x128xf32, #tpu.memory_space<vmem>>, vector<128x128xf32>
    %31 = arith.truncf %30 : vector<128x128xf32> to vector<128x128xbf16>
    %cst_11 = arith.constant dense<0.000000e+00> : vector<128x128xf32>
    %32 = tpu.matmul %29, %31, %cst_11 {dimension_numbers = #tpu.dot_dimension_numbers<[1], [0], [0], [1], [0, 0, 1, 1], [], []>} : vector<128x128xbf16>, vector<128x128xbf16>, vector<128x128xf32> -> vector<128x128xf32>
    %33 = arith.truncf %32 : vector<128x128xf32> to vector<128x128xbf16>
    %c0_12 = arith.constant 0 : index
    %c0_13 = arith.constant 0 : index
    %34 = vector.load %arg3[%c0_12, %c0_13] : memref<128x128xbf16, #tpu.memory_space<vmem>>, vector<128x128xbf16>
    %cst_14 = arith.constant dense<0.000000e+00> : vector<128x128xf32>
    %35 = tpu.matmul %33, %34, %cst_14 {dimension_numbers = #tpu.dot_dimension_numbers<[1], [0], [0], [1], [0, 0, 1, 1], [], []>} : vector<128x128xbf16>, vector<128x128xbf16>, vector<128x128xf32> -> vector<128x128xf32>
    %c0_15 = arith.constant 0 : index
    %c0_16 = arith.constant 0 : index
    %36 = vector.load %arg4[%c0_15, %c0_16] : memref<1x128xf32, #tpu.memory_space<vmem>>, vector<1x128xf32>
    %37 = vector.broadcast %36 : vector<1x128xf32> to vector<128x128xf32>
    %38 = arith.addf %35, %37 : vector<128x128xf32>
    %cst_17 = arith.constant 0.000000e+00 : f32
    %39 = vector.broadcast %cst_17 : f32 to vector<128x128xf32>
    %40 = arith.maximumf %38, %39 : vector<128x128xf32>
    %41 = arith.truncf %40 : vector<128x128xf32> to vector<128x128xbf16>
    %c0_18 = arith.constant 0 : index
    %c0_19 = arith.constant 0 : index
    %42 = vector.load %arg5[%c0_18, %c0_19] : memref<128x128xbf16, #tpu.memory_space<vmem>>, vector<128x128xbf16>
    %cst_20 = arith.constant dense<0.000000e+00> : vector<128x128xf32>
    %43 = tpu.matmul %41, %42, %cst_20 {dimension_numbers = #tpu.dot_dimension_numbers<[1], [0], [0], [1], [0, 0, 1, 1], [], []>} : vector<128x128xbf16>, vector<128x128xbf16>, vector<128x128xf32> -> vector<128x128xf32>
    %c0_21 = arith.constant 0 : index
    %c0_22 = arith.constant 0 : index
    %44 = vector.load %arg6[%c0_21, %c0_22] : memref<1x128xf32, #tpu.memory_space<vmem>>, vector<1x128xf32>
    %45 = vector.broadcast %44 : vector<1x128xf32> to vector<128x128xf32>
    %46 = arith.addf %43, %45 : vector<128x128xf32>
    %cst_23 = arith.constant 0.000000e+00 : f32
    %47 = vector.broadcast %cst_23 : f32 to vector<128x128xf32>
    %48 = arith.maximumf %46, %47 : vector<128x128xf32>
    %49 = arith.truncf %48 : vector<128x128xf32> to vector<128x128xbf16>
    %cst_24 = arith.constant dense<0.000000e+00> : vector<128x128xf32>
    %50 = tpu.matmul %29, %49, %cst_24 {dimension_numbers = #tpu.dot_dimension_numbers<[1], [0], [0], [1], [0, 0, 1, 1], [], []>} : vector<128x128xbf16>, vector<128x128xbf16>, vector<128x128xf32> -> vector<128x128xf32>
    %51 = arith.truncf %50 : vector<128x128xf32> to vector<128x128xbf16>
    %c0_25 = arith.constant 0 : index
    %c0_26 = arith.constant 0 : index
    %52 = vector.load %arg7[%c0_25, %c0_26] : memref<128x128xbf16, #tpu.memory_space<vmem>>, vector<128x128xbf16>
    %cst_27 = arith.constant dense<0.000000e+00> : vector<128x128xf32>
    %53 = tpu.matmul %51, %52, %cst_27 {dimension_numbers = #tpu.dot_dimension_numbers<[1], [0], [0], [1], [0, 0, 1, 1], [], []>} : vector<128x128xbf16>, vector<128x128xbf16>, vector<128x128xf32> -> vector<128x128xf32>
    %c0_28 = arith.constant 0 : index
    %c0_29 = arith.constant 0 : index
    %54 = vector.load %arg8[%c0_28, %c0_29] : memref<1x128xf32, #tpu.memory_space<vmem>>, vector<1x128xf32>
    %55 = vector.broadcast %54 : vector<1x128xf32> to vector<128x128xf32>
    %56 = arith.addf %53, %55 : vector<128x128xf32>
    %cst_30 = arith.constant 0.000000e+00 : f32
    %57 = vector.broadcast %cst_30 : f32 to vector<128x128xf32>
    %58 = arith.maximumf %56, %57 : vector<128x128xf32>
    %59 = arith.truncf %58 : vector<128x128xf32> to vector<128x128xbf16>
    %c0_31 = arith.constant 0 : index
    %c0_32 = arith.constant 0 : index
    %60 = vector.load %arg9[%c0_31, %c0_32] : memref<128x128xbf16, #tpu.memory_space<vmem>>, vector<128x128xbf16>
    %cst_33 = arith.constant dense<0.000000e+00> : vector<128x128xf32>
    %61 = tpu.matmul %59, %60, %cst_33 {dimension_numbers = #tpu.dot_dimension_numbers<[1], [0], [0], [1], [0, 0, 1, 1], [], []>} : vector<128x128xbf16>, vector<128x128xbf16>, vector<128x128xf32> -> vector<128x128xf32>
    %c0_34 = arith.constant 0 : index
    %c0_35 = arith.constant 0 : index
    %62 = vector.load %arg10[%c0_34, %c0_35] : memref<1x128xf32, #tpu.memory_space<vmem>>, vector<1x128xf32>
    %63 = vector.broadcast %62 : vector<1x128xf32> to vector<128x128xf32>
    %64 = arith.addf %61, %63 : vector<128x128xf32>
    %cst_36 = arith.constant 0.000000e+00 : f32
    %65 = vector.broadcast %cst_36 : f32 to vector<128x128xf32>
    %66 = arith.maximumf %64, %65 : vector<128x128xf32>
    %67 = arith.truncf %66 : vector<128x128xf32> to vector<128x128xbf16>
    %cst_37 = arith.constant dense<0.000000e+00> : vector<128x128xf32>
    %68 = tpu.matmul %29, %67, %cst_37 {dimension_numbers = #tpu.dot_dimension_numbers<[1], [0], [0], [1], [0, 0, 1, 1], [], []>} : vector<128x128xbf16>, vector<128x128xbf16>, vector<128x128xf32> -> vector<128x128xf32>
    %69 = arith.truncf %68 : vector<128x128xf32> to vector<128x128xbf16>
    %c0_38 = arith.constant 0 : index
    %c0_39 = arith.constant 0 : index
    %70 = vector.load %arg11[%c0_38, %c0_39] : memref<128x128xbf16, #tpu.memory_space<vmem>>, vector<128x128xbf16>
    %cst_40 = arith.constant dense<0.000000e+00> : vector<128x128xf32>
    %71 = tpu.matmul %69, %70, %cst_40 {dimension_numbers = #tpu.dot_dimension_numbers<[1], [0], [0], [1], [0, 0, 1, 1], [], []>} : vector<128x128xbf16>, vector<128x128xbf16>, vector<128x128xf32> -> vector<128x128xf32>
    %c0_41 = arith.constant 0 : index
    %c0_42 = arith.constant 0 : index
    %72 = vector.load %arg12[%c0_41, %c0_42] : memref<1x128xf32, #tpu.memory_space<vmem>>, vector<1x128xf32>
    %73 = vector.broadcast %72 : vector<1x128xf32> to vector<128x128xf32>
    %74 = arith.addf %71, %73 : vector<128x128xf32>
    %cst_43 = arith.constant 0.000000e+00 : f32
    %75 = vector.broadcast %cst_43 : f32 to vector<128x128xf32>
    %76 = arith.maximumf %74, %75 : vector<128x128xf32>
    %77 = arith.truncf %76 : vector<128x128xf32> to vector<128x128xbf16>
    %c0_44 = arith.constant 0 : index
    %c0_45 = arith.constant 0 : index
    %78 = vector.load %arg13[%c0_44, %c0_45] : memref<128x128xbf16, #tpu.memory_space<vmem>>, vector<128x128xbf16>
    %cst_46 = arith.constant dense<0.000000e+00> : vector<128x128xf32>
    %79 = tpu.matmul %77, %78, %cst_46 {dimension_numbers = #tpu.dot_dimension_numbers<[1], [0], [0], [1], [0, 0, 1, 1], [], []>} : vector<128x128xbf16>, vector<128x128xbf16>, vector<128x128xf32> -> vector<128x128xf32>
    %c0_47 = arith.constant 0 : index
    %c0_48 = arith.constant 0 : index
    %80 = vector.load %arg14[%c0_47, %c0_48] : memref<1x128xf32, #tpu.memory_space<vmem>>, vector<1x128xf32>
    %81 = vector.broadcast %80 : vector<1x128xf32> to vector<128x128xf32>
    %82 = arith.addf %79, %81 : vector<128x128xf32>
    %cst_49 = arith.constant 0.000000e+00 : f32
    %83 = vector.broadcast %cst_49 : f32 to vector<128x128xf32>
    %84 = arith.maximumf %82, %83 : vector<128x128xf32>
    %85 = arith.truncf %84 : vector<128x128xf32> to vector<128x128xbf16>
    %86 = tpu.iota {dimensions = array<i32: 0>} : vector<128x1xi32>
    %c16_i32_50 = arith.constant 16 : i32
    %87 = vector.broadcast %c16_i32_50 : i32 to vector<128x1xi32>
    %88 = arith.cmpi slt, %86, %87 : vector<128x1xi32>
    %89 = arith.extf %85 : vector<128x128xbf16> to vector<128x128xf32>
    %cst_51 = arith.constant 0.000000e+00 : f32
    %90 = vector.shape_cast %88 : vector<128x1xi1> to vector<128x1xi1>
    %91 = vector.broadcast %90 : vector<128x1xi1> to vector<128x128xi1>
    %92 = vector.broadcast %cst_51 : f32 to vector<128x128xf32>
    %93 = arith.select %91, %89, %92 : vector<128x128xi1>, vector<128x128xf32>
    %cst_52 = arith.constant dense<0.000000e+00> : vector<128xf32>
    %94 = vector.multi_reduction <add>, %93, %cst_52 [0] : vector<128x128xf32> to vector<128xf32>
    %95 = vector.shape_cast %94 : vector<128xf32> to vector<1x128xf32>
    %cst_53 = arith.constant 6.250000e-02 : f32
    %96 = vector.broadcast %cst_53 : f32 to vector<1x128xf32>
    %97 = arith.mulf %95, %96 : vector<1x128xf32>
    %98 = arith.truncf %97 : vector<1x128xf32> to vector<1x128xbf16>
    %c0_54 = arith.constant 0 : index
    %c0_55 = arith.constant 0 : index
    %99 = vector.load %arg15[%c0_54, %c0_55] : memref<128x128xbf16, #tpu.memory_space<vmem>>, vector<128x128xbf16>
    %cst_56 = arith.constant dense<0.000000e+00> : vector<1x128xf32>
    %100 = tpu.matmul %98, %99, %cst_56 {dimension_numbers = #tpu.dot_dimension_numbers<[1], [0], [0], [1], [0, 0, 1, 1], [], []>} : vector<1x128xbf16>, vector<128x128xbf16>, vector<1x128xf32> -> vector<1x128xf32>
    %c0_57 = arith.constant 0 : index
    %c0_58 = arith.constant 0 : index
    %101 = vector.load %arg16[%c0_57, %c0_58] : memref<1x128xf32, #tpu.memory_space<vmem>>, vector<1x128xf32>
    %102 = arith.addf %100, %101 : vector<1x128xf32>
    %cst_59 = arith.constant 0.000000e+00 : f32
    %103 = vector.broadcast %cst_59 : f32 to vector<1x128xf32>
    %104 = arith.maximumf %102, %103 : vector<1x128xf32>
    %105 = arith.truncf %104 : vector<1x128xf32> to vector<1x128xbf16>
    %c0_60 = arith.constant 0 : index
    %c0_61 = arith.constant 0 : index
    %106 = vector.load %arg17[%c0_60, %c0_61] : memref<128x128xbf16, #tpu.memory_space<vmem>>, vector<128x128xbf16>
    %cst_62 = arith.constant dense<0.000000e+00> : vector<1x128xf32>
    %107 = tpu.matmul %105, %106, %cst_62 {dimension_numbers = #tpu.dot_dimension_numbers<[1], [0], [0], [1], [0, 0, 1, 1], [], []>} : vector<1x128xbf16>, vector<128x128xbf16>, vector<1x128xf32> -> vector<1x128xf32>
    %c0_63 = arith.constant 0 : index
    %c0_64 = arith.constant 0 : index
    %108 = vector.load %arg18[%c0_63, %c0_64] : memref<1x128xf32, #tpu.memory_space<vmem>>, vector<1x128xf32>
    %109 = arith.addf %107, %108 : vector<1x128xf32>
    %c0_65 = arith.constant 0 : index
    %c0_66 = arith.constant 0 : index
    %110 = vector.load %arg19[%c0_65, %c0_66] : memref<1x128xf32, #tpu.memory_space<vmem>>, vector<1x128xf32>
    tpu.vector_store %arg19[%c0_65, %c0_66], %109 {strides = array<i32>} : memref<1x128xf32, #tpu.memory_space<vmem>>, vector<1x128xf32>,
    return
  }
}

</mosaic_0001>

<llo_original>
// kernel: gin_3l_forward.1
$region0: #{gin_3l_forward.1}
  #allocation0 [shape = 'u32[]', space=smem, size = 0x4, offset = 0x4, fixed_abs, tag = 'smem constant byte address 0x4 - core index']
  #allocation1 [shape = 'u32[72,128]{1,0:T(1,128)}', space=vmem, size = 0x9000, scoped, tag = 'internal scratch']
  %s0 = inlined_call_operand.vmem [shape: s32[1,128], index: 0, kind: input, shape index: {}]
  %s1 = inlined_call_operand.vmem [shape: s32[1,128], index: 1, kind: input, shape index: {}]
  %s2 = inlined_call_operand.vmem [shape: f32[128,128], index: 2, kind: input, shape index: {}]
  %s3 = inlined_call_operand.vmem [shape: bf16[128,128], index: 3, kind: input, shape index: {}]
  %s4 = inlined_call_operand.vmem [shape: f32[1,128], index: 4, kind: input, shape index: {}]
  %s5 = inlined_call_operand.vmem [shape: bf16[128,128], index: 5, kind: input, shape index: {}]
  %s6 = inlined_call_operand.vmem [shape: f32[1,128], index: 6, kind: input, shape index: {}]
  %s7 = inlined_call_operand.vmem [shape: bf16[128,128], index: 7, kind: input, shape index: {}]
  %s8 = inlined_call_operand.vmem [shape: f32[1,128], index: 8, kind: input, shape index: {}]
  %s9 = inlined_call_operand.vmem [shape: bf16[128,128], index: 9, kind: input, shape index: {}]
  %s10 = inlined_call_operand.vmem [shape: f32[1,128], index: 10, kind: input, shape index: {}]
  %s11 = inlined_call_operand.vmem [shape: bf16[128,128], index: 11, kind: input, shape index: {}]
  %s12 = inlined_call_operand.vmem [shape: f32[1,128], index: 12, kind: input, shape index: {}]
  %s13 = inlined_call_operand.vmem [shape: bf16[128,128], index: 13, kind: input, shape index: {}]
  %s14 = inlined_call_operand.vmem [shape: f32[1,128], index: 14, kind: input, shape index: {}]
  %s15 = inlined_call_operand.vmem [shape: bf16[128,128], index: 15, kind: input, shape index: {}]
  %s16 = inlined_call_operand.vmem [shape: f32[1,128], index: 16, kind: input, shape index: {}]
  %s17 = inlined_call_operand.vmem [shape: bf16[128,128], index: 17, kind: input, shape index: {}]
  %s18 = inlined_call_operand.vmem [shape: f32[1,128], index: 18, kind: input, shape index: {}]
  %s19 = inlined_call_operand.hbm [shape: f32[1,128], index: 19, kind: output, shape index: {}]
  %s20 = sld [smem:[#allocation0]]
  $region86: #{gin_3l_forward.1} parent=0
    _
  %s22 = ssub.s32 1, %s20
  %s23 = scalar_select 0, %s22, %s20
  $region1: #{gin_3l_forward.1} parent=0
    #allocation2 [shape = 'u8[512]{0}', space=vmem, size = 0x400, scoped, tag = 'output window, operand 0, single buffered']
    #allocation3 [shape = 's32[1]{0}', space=sflag, size = 0x4, scoped, tag = 'scoped memory for gin_3l_forward.1']
    %24 = vsyncpa [#allocation3], 0
    // Predicated region
    $region2: #{gin_3l_forward.1} parent=1 // pred_check
      _
    $region3: #{gin_3l_forward.1} parent=1 // pred_check_branch
      %26 = sbr.rel (0) target = $region5
    $region4: #{gin_3l_forward.1} parent=1 // pred_region
      _
    $region5: #{gin_3l_forward.1} parent=1 // pred_fallthru
      _
    // Predicated region
    $region6: #{gin_3l_forward.1} parent=1 // pred_check
      _
    $region7: #{gin_3l_forward.1} parent=1 // pred_check_branch
      %28 = sbr.rel (0) target = $region9
    $region8: #{gin_3l_forward.1} parent=1 // pred_region
      _
    $region9: #{gin_3l_forward.1} parent=1 // pred_fallthru
      _
    // Predicated region
    $region10: #{gin_3l_forward.1} parent=1 // pred_check
      _
    $region11: #{gin_3l_forward.1} parent=1 // pred_check_branch
      %30 = sbr.rel (0) target = $region13
    $region12: #{gin_3l_forward.1} parent=1 // pred_region
      _
    $region13: #{gin_3l_forward.1} parent=1 // pred_fallthru
      _
    // Predicated region
    $region14: #{gin_3l_forward.1} parent=1 // pred_check
      _
    $region15: #{gin_3l_forward.1} parent=1 // pred_check_branch
      %32 = sbr.rel (0) target = $region17
    $region16: #{gin_3l_forward.1} parent=1 // pred_region
      _
    $region17: #{gin_3l_forward.1} parent=1 // pred_fallthru
      _
    // Predicated region
    $region18: #{gin_3l_forward.1} parent=1 // pred_check
      _
    $region19: #{gin_3l_forward.1} parent=1 // pred_check_branch
      %34 = sbr.rel (0) target = $region21
    $region20: #{gin_3l_forward.1} parent=1 // pred_region
      _
    $region21: #{gin_3l_forward.1} parent=1 // pred_fallthru
      _
    // Predicated region
    $region22: #{gin_3l_forward.1} parent=1 // pred_check
      _
    $region23: #{gin_3l_forward.1} parent=1 // pred_check_branch
      %36 = sbr.rel (0) target = $region25
    $region24: #{gin_3l_forward.1} parent=1 // pred_region
      _
    $region25: #{gin_3l_forward.1} parent=1 // pred_fallthru
      _
    // Predicated region
    $region26: #{gin_3l_forward.1} parent=1 // pred_check
      _
    $region27: #{gin_3l_forward.1} parent=1 // pred_check_branch
      %38 = sbr.rel (0) target = $region29
    $region28: #{gin_3l_forward.1} parent=1 // pred_region
      _
    $region29: #{gin_3l_forward.1} parent=1 // pred_fallthru
      _
    // Predicated region
    $region30: #{gin_3l_forward.1} parent=1 // pred_check
      _
    $region31: #{gin_3l_forward.1} parent=1 // pred_check_branch
      %40 = sbr.rel (0) target = $region33
    $region32: #{gin_3l_forward.1} parent=1 // pred_region
      _
    $region33: #{gin_3l_forward.1} parent=1 // pred_fallthru
      _
    // Predicated region
    $region34: #{gin_3l_forward.1} parent=1 // pred_check
      _
    $region35: #{gin_3l_forward.1} parent=1 // pred_check_branch
      %42 = sbr.rel (0) target = $region37
    $region36: #{gin_3l_forward.1} parent=1 // pred_region
      _
    $region37: #{gin_3l_forward.1} parent=1 // pred_fallthru
      _
    // Predicated region
    $region38: #{gin_3l_forward.1} parent=1 // pred_check
      _
    $region39: #{gin_3l_forward.1} parent=1 // pred_check_branch
      %44 = sbr.rel (0) target = $region41
    $region40: #{gin_3l_forward.1} parent=1 // pred_region
      _
    $region41: #{gin_3l_forward.1} parent=1 // pred_fallthru
      _
    // Predicated region
    $region42: #{gin_3l_forward.1} parent=1 // pred_check
      _
    $region43: #{gin_3l_forward.1} parent=1 // pred_check_branch
      %46 = sbr.rel (0) target = $region45
    $region44: #{gin_3l_forward.1} parent=1 // pred_region
      _
    $region45: #{gin_3l_forward.1} parent=1 // pred_fallthru
      _
    // Predicated region
    $region46: #{gin_3l_forward.1} parent=1 // pred_check
      _
    $region47: #{gin_3l_forward.1} parent=1 // pred_check_branch
      %48 = sbr.rel (0) target = $region49
    $region48: #{gin_3l_forward.1} parent=1 // pred_region
      _
    $region49: #{gin_3l_forward.1} parent=1 // pred_fallthru
      _
    // Predicated region
    $region50: #{gin_3l_forward.1} parent=1 // pred_check
      _
    $region51: #{gin_3l_forward.1} parent=1 // pred_check_branch
      %50 = sbr.rel (0) target = $region53
    $region52: #{gin_3l_forward.1} parent=1 // pred_region
      _
    $region53: #{gin_3l_forward.1} parent=1 // pred_fallthru
      _
    // Predicated region
    $region54: #{gin_3l_forward.1} parent=1 // pred_check
      _
    $region55: #{gin_3l_forward.1} parent=1 // pred_check_branch
      %52 = sbr.rel (0) target = $region57
    $region56: #{gin_3l_forward.1} parent=1 // pred_region
      _
    $region57: #{gin_3l_forward.1} parent=1 // pred_fallthru
      _
    // Predicated region
    $region58: #{gin_3l_forward.1} parent=1 // pred_check
      _
    $region59: #{gin_3l_forward.1} parent=1 // pred_check_branch
      %54 = sbr.rel (0) target = $region61
    $region60: #{gin_3l_forward.1} parent=1 // pred_region
      _
    $region61: #{gin_3l_forward.1} parent=1 // pred_fallthru
      _
    // Predicated region
    $region62: #{gin_3l_forward.1} parent=1 // pred_check
      _
    $region63: #{gin_3l_forward.1} parent=1 // pred_check_branch
      %56 = sbr.rel (0) target = $region65
    $region64: #{gin_3l_forward.1} parent=1 // pred_region
      _
    $region65: #{gin_3l_forward.1} parent=1 // pred_fallthru
      _
    // Predicated region
    $region66: #{gin_3l_forward.1} parent=1 // pred_check
      _
    $region67: #{gin_3l_forward.1} parent=1 // pred_check_branch
      %58 = sbr.rel (0) target = $region69
    $region68: #{gin_3l_forward.1} parent=1 // pred_region
      _
    $region69: #{gin_3l_forward.1} parent=1 // pred_fallthru
      _
    // Predicated region
    $region70: #{gin_3l_forward.1} parent=1 // pred_check
      _
    $region71: #{gin_3l_forward.1} parent=1 // pred_check_branch
      %60 = sbr.rel (0) target = $region73
    $region72: #{gin_3l_forward.1} parent=1 // pred_region
      _
    $region73: #{gin_3l_forward.1} parent=1 // pred_fallthru
      _
    // Predicated region
    $region74: #{gin_3l_forward.1} parent=1 // pred_check
      _
    $region75: #{gin_3l_forward.1} parent=1 // pred_check_branch
      %62 = sbr.rel (0) target = $region77
    $region76: #{gin_3l_forward.1} parent=1 // pred_region
      _
    $region77: #{gin_3l_forward.1} parent=1 // pred_fallthru
      _
    %v63 = vld [vmem:[%s0] sm:$0x1]
    %v64 = vld [vmem:[%s1] sm:$0x1]
    %v65 = vlaneseq
    %v66 = vshrl.u32 %v65, 7
    %v67 = vadd.s32 %v66, 8
    %v68 = vadd.s32 %v66, 16
    %v69 = vadd.s32 %v66, 24
    %v70 = vadd.s32 %v66, 32
    %v71 = vadd.s32 %v66, 40
    %v72 = vadd.s32 %v66, 48
    %v73 = vadd.s32 %v66, 56
    %v74 = vadd.s32 %v66, 64
    %v75 = vadd.s32 %v66, 72
    %v76 = vadd.s32 %v66, 80
    %v77 = vadd.s32 %v66, 88
    %v78 = vadd.s32 %v66, 96
    %v79 = vadd.s32 %v66, 104
    %v80 = vadd.s32 %v66, 112
    %v81 = vadd.s32 %v66, 120
    %vm82 = vcmp.ne.s32.totalorder %v63, %v64
    %v83 = vperm.slane %v64, 0
    %vm84 = vcmp.eq.s32.totalorder %v66, %v83
    %vm85 = vcmp.eq.s32.totalorder %v67, %v83
    %vm86 = vcmp.eq.s32.totalorder %v68, %v83
    %vm87 = vcmp.eq.s32.totalorder %v69, %v83
    %vm88 = vcmp.eq.s32.totalorder %v70, %v83
    %vm89 = vcmp.eq.s32.totalorder %v71, %v83
    %vm90 = vcmp.eq.s32.totalorder %v72, %v83
    %vm91 = vcmp.eq.s32.totalorder %v73, %v83
    %vm92 = vcmp.eq.s32.totalorder %v74, %v83
    %vm93 = vcmp.eq.s32.totalorder %v75, %v83
    %vm94 = vcmp.eq.s32.totalorder %v76, %v83
    %vm95 = vcmp.eq.s32.totalorder %v77, %v83
    %vm96 = vcmp.eq.s32.totalorder %v78, %v83
    %vm97 = vcmp.eq.s32.totalorder %v79, %v83
    %vm98 = vcmp.eq.s32.totalorder %v80, %v83
    %vm99 = vcmp.eq.s32.totalorder %v81, %v83
    %v100 = vsel %vm82, 1, 0
    %v101 = vperm.slane %v100, 0
    %vm102 = vcmp.eq.s32.totalorder %v101, 1
    %vm103 = vmand %vm84, %vm102
    %vm104 = vmand %vm85, %vm102
    %vm105 = vmand %vm86, %vm102
    %vm106 = vmand %vm87, %vm102
    %vm107 = vmand %vm88, %vm102
    %vm108 = vmand %vm89, %vm102
    %vm109 = vmand %vm90, %vm102
    %vm110 = vmand %vm91, %vm102
    %vm111 = vmand %vm92, %vm102
    %vm112 = vmand %vm93, %vm102
    %vm113 = vmand %vm94, %vm102
    %vm114 = vmand %vm95, %vm102
    %vm115 = vmand %vm96, %vm102
    %vm116 = vmand %vm97, %vm102
    %vm117 = vmand %vm98, %vm102
    %vm118 = vmand %vm99, %vm102
    %v119 = vsel %vm103, 1.0, 0.0
    %v120 = vsel %vm104, 1.0, 0.0
    %v121 = vsel %vm105, 1.0, 0.0
    %v122 = vsel %vm106, 1.0, 0.0
    %v123 = vsel %vm107, 1.0, 0.0
    %v124 = vsel %vm108, 1.0, 0.0
    %v125 = vsel %vm109, 1.0, 0.0
    %v126 = vsel %vm110, 1.0, 0.0
    %v127 = vsel %vm111, 1.0, 0.0
    %v128 = vsel %vm112, 1.0, 0.0
    %v129 = vsel %vm113, 1.0, 0.0
    %v130 = vsel %vm114, 1.0, 0.0
    %v131 = vsel %vm115, 1.0, 0.0
    %v132 = vsel %vm116, 1.0, 0.0
    %v133 = vsel %vm117, 1.0, 0.0
    %v134 = vsel %vm118, 1.0, 0.0
    %v135 = vpack.c.bf16 %v120, %v119
    %v136 = vpack.c.bf16 %v122, %v121
    %v137 = vpack.c.bf16 %v124, %v123
    %v138 = vpack.c.bf16 %v126, %v125
    %v139 = vpack.c.bf16 %v128, %v127
    %v140 = vpack.c.bf16 %v130, %v129
    %v141 = vpack.c.bf16 %v132, %v131
    %v142 = vpack.c.bf16 %v134, %v133
    %v143 = vperm.slane %v63, 0
    %vm144 = vcmp.eq.s32.totalorder %v66, %v143
    %vm145 = vcmp.eq.s32.totalorder %v67, %v143
    %vm146 = vcmp.eq.s32.totalorder %v68, %v143
    %vm147 = vcmp.eq.s32.totalorder %v69, %v143
    %vm148 = vcmp.eq.s32.totalorder %v70, %v143
    %vm149 = vcmp.eq.s32.totalorder %v71, %v143
    %vm150 = vcmp.eq.s32.totalorder %v72, %v143
    %vm151 = vcmp.eq.s32.totalorder %v73, %v143
    %vm152 = vcmp.eq.s32.totalorder %v74, %v143
    %vm153 = vcmp.eq.s32.totalorder %v75, %v143
    %vm154 = vcmp.eq.s32.totalorder %v76, %v143
    %vm155 = vcmp.eq.s32.totalorder %v77, %v143
    %vm156 = vcmp.eq.s32.totalorder %v78, %v143
    %vm157 = vcmp.eq.s32.totalorder %v79, %v143
    %vm158 = vcmp.eq.s32.totalorder %v80, %v143
    %vm159 = vcmp.eq.s32.totalorder %v81, %v143
    %v160 = vsel %vm144, 1.0, 0.0
    %v161 = vsel %vm145, 1.0, 0.0
    %v162 = vsel %vm146, 1.0, 0.0
    %v163 = vsel %vm147, 1.0, 0.0
    %v164 = vsel %vm148, 1.0, 0.0
    %v165 = vsel %vm149, 1.0, 0.0
    %v166 = vsel %vm150, 1.0, 0.0
    %v167 = vsel %vm151, 1.0, 0.0
    %v168 = vsel %vm152, 1.0, 0.0
    %v169 = vsel %vm153, 1.0, 0.0
    %v170 = vsel %vm154, 1.0, 0.0
    %v171 = vsel %vm155, 1.0, 0.0
    %v172 = vsel %vm156, 1.0, 0.0
    %v173 = vsel %vm157, 1.0, 0.0
    %v174 = vsel %vm158, 1.0, 0.0
    %v175 = vsel %vm159, 1.0, 0.0
    %v176 = vpack.c.bf16 %v161, %v160
    %v177 = vpack.c.bf16 %v163, %v162
    %v178 = vpack.c.bf16 %v165, %v164
    %v179 = vpack.c.bf16 %v167, %v166
    %v180 = vpack.c.bf16 %v169, %v168
    %v181 = vpack.c.bf16 %v171, %v170
    %v182 = vpack.c.bf16 %v173, %v172
    %v183 = vpack.c.bf16 %v175, %v174
    %v184 = vlaneseq
    %v185 = vand.u32 %v184, 127
    %vm186 = vcmp.eq.s32.totalorder %v66, %v185
    %vm187 = vcmp.eq.s32.totalorder %v67, %v185
    %vm188 = vcmp.eq.s32.totalorder %v68, %v185
    %vm189 = vcmp.eq.s32.totalorder %v69, %v185
    %vm190 = vcmp.eq.s32.totalorder %v70, %v185
    %vm191 = vcmp.eq.s32.totalorder %v71, %v185
    %vm192 = vcmp.eq.s32.totalorder %v72, %v185
    %vm193 = vcmp.eq.s32.totalorder %v73, %v185
    %vm194 = vcmp.eq.s32.totalorder %v74, %v185
    %vm195 = vcmp.eq.s32.totalorder %v75, %v185
    %vm196 = vcmp.eq.s32.totalorder %v76, %v185
    %vm197 = vcmp.eq.s32.totalorder %v77, %v185
    %vm198 = vcmp.eq.s32.totalorder %v78, %v185
    %vm199 = vcmp.eq.s32.totalorder %v79, %v185
    %vm200 = vcmp.eq.s32.totalorder %v80, %v185
    %vm201 = vcmp.eq.s32.totalorder %v81, %v185
    %vm202 = vcmp.lt.s32.totalorder %v66, 16
    %vm203 = vcmp.lt.s32.totalorder %v67, 16
    %vm204 = vcmp.lt.s32.totalorder %v68, 16
    %vm205 = vcmp.lt.s32.totalorder %v69, 16
    %vm206 = vcmp.lt.s32.totalorder %v70, 16
    %vm207 = vcmp.lt.s32.totalorder %v71, 16
    %vm208 = vcmp.lt.s32.totalorder %v72, 16
    %vm209 = vcmp.lt.s32.totalorder %v73, 16
    %vm210 = vcmp.lt.s32.totalorder %v74, 16
    %vm211 = vcmp.lt.s32.totalorder %v75, 16
    %vm212 = vcmp.lt.s32.totalorder %v76, 16
    %vm213 = vcmp.lt.s32.totalorder %v77, 16
    %vm214 = vcmp.lt.s32.totalorder %v78, 16
    %vm215 = vcmp.lt.s32.totalorder %v79, 16
    %vm216 = vcmp.lt.s32.totalorder %v80, 16
    %vm217 = vcmp.lt.s32.totalorder %v81, 16
    %vm218 = vmand %vm186, %vm202
    %vm219 = vmand %vm187, %vm203
    %vm220 = vmand %vm188, %vm204
    %vm221 = vmand %vm189, %vm205
    %vm222 = vmand %vm190, %vm206
    %vm223 = vmand %vm191, %vm207
    %vm224 = vmand %vm192, %vm208
    %vm225 = vmand %vm193, %vm209
    %vm226 = vmand %vm194, %vm210
    %vm227 = vmand %vm195, %vm211
    %vm228 = vmand %vm196, %vm212
    %vm229 = vmand %vm197, %vm213
    %vm230 = vmand %vm198, %vm214
    %vm231 = vmand %vm199, %vm215
    %vm232 = vmand %vm200, %vm216
    %vm233 = vmand %vm201, %vm217
    %v234 = vsel %vm218, 1.0, 0.0
    %v235 = vsel %vm219, 1.0, 0.0
    %v236 = vsel %vm220, 1.0, 0.0
    %v237 = vsel %vm221, 1.0, 0.0
    %v238 = vsel %vm222, 1.0, 0.0
    %v239 = vsel %vm223, 1.0, 0.0
    %v240 = vsel %vm224, 1.0, 0.0
    %v241 = vsel %vm225, 1.0, 0.0
    %v242 = vsel %vm226, 1.0, 0.0
    %v243 = vsel %vm227, 1.0, 0.0
    %v244 = vsel %vm228, 1.0, 0.0
    %v245 = vsel %vm229, 1.0, 0.0
    %v246 = vsel %vm230, 1.0, 0.0
    %v247 = vsel %vm231, 1.0, 0.0
    %v248 = vsel %vm232, 1.0, 0.0
    %v249 = vsel %vm233, 1.0, 0.0
    %250 = vmatpush.bf16.xpose.msra.mxu0 %v183
    %251 = vmatpush.bf16.xpose.msra.mxu0 %v182
    %252 = vmatpush.bf16.xpose.msra.mxu0 %v181
    %253 = vmatpush.bf16.xpose.msra.mxu0 %v180
    %254 = vmatpush.bf16.xpose.msra.mxu0 %v179
    %255 = vmatpush.bf16.xpose.msra.mxu0 %v178
    %256 = vmatpush.bf16.xpose.msra.mxu0 %v177
    %257 = vmatpush.bf16.xpose.msra.mxu0 %v176
    %258 = vmatmul.bf16.gmra.mxu0 %v135
    %v259 = vpop.f32.mrf.mxu0
    %v260 = vadd.f32 %v234, %v259
    %v261 = vpop.f32.mrf.mxu0
    %v262 = vadd.f32 %v235, %v261
    %263 = vmatmul.bf16.gmra.mxu0 %v136
    %v264 = vpop.f32.mrf.mxu0
    %v265 = vadd.f32 %v236, %v264
    %v266 = vpop.f32.mrf.mxu0
    %v267 = vadd.f32 %v237, %v266
    %268 = vmatmul.bf16.gmra.mxu0 %v137
    %v269 = vpop.f32.mrf.mxu0
    %v270 = vadd.f32 %v238, %v269
    %v271 = vpop.f32.mrf.mxu0
    %v272 = vadd.f32 %v239, %v271
    %273 = vmatmul.bf16.gmra.mxu0 %v138
    %v274 = vpop.f32.mrf.mxu0
    %v275 = vadd.f32 %v240, %v274
    %v276 = vpop.f32.mrf.mxu0
    %v277 = vadd.f32 %v241, %v276
    %278 = vmatmul.bf16.gmra.mxu0 %v139
    %v279 = vpop.f32.mrf.mxu0
    %v280 = vadd.f32 %v242, %v279
    %v281 = vpop.f32.mrf.mxu0
    %v282 = vadd.f32 %v243, %v281
    %283 = vmatmul.bf16.gmra.mxu0 %v140
    %v284 = vpop.f32.mrf.mxu0
    %v285 = vadd.f32 %v244, %v284
    %v286 = vpop.f32.mrf.mxu0
    %v287 = vadd.f32 %v245, %v286
    %288 = vmatmul.bf16.gmra.mxu0 %v141
    %v289 = vpop.f32.mrf.mxu0
    %v290 = vadd.f32 %v246, %v289
    %v291 = vpop.f32.mrf.mxu0
    %v292 = vadd.f32 %v247, %v291
    %293 = vmatmul.bf16.gmra.mxu0 %v142
    %v294 = vpop.f32.mrf.mxu0
    %v295 = vadd.f32 %v248, %v294
    %v296 = vpop.f32.mrf.mxu0
    %v297 = vadd.f32 %v249, %v296
    %298 = vdwg.mxu0
    %v299 = vpack.c.bf16 %v262, %v260
    %v300 = vpack.c.bf16 %v267, %v265
    %v301 = vpack.c.bf16 %v272, %v270
    %v302 = vpack.c.bf16 %v277, %v275
    %v303 = vpack.c.bf16 %v282, %v280
    %v304 = vpack.c.bf16 %v287, %v285
    %v305 = vpack.c.bf16 %v292, %v290
    %v306 = vpack.c.bf16 %v297, %v295
    %v307 = vld [vmem:[%s2] sm:$0xff]
    %v308 = vld [vmem:[%s2 + $0x8] sm:$0xff]
    %v309 = vld [vmem:[%s2 + $0x10] sm:$0xff]
    %v310 = vld [vmem:[%s2 + $0x18] sm:$0xff]
    %v311 = vld [vmem:[%s2 + $0x20] sm:$0xff]
    %v312 = vld [vmem:[%s2 + $0x28] sm:$0xff]
    %v313 = vld [vmem:[%s2 + $0x30] sm:$0xff]
    %v314 = vld [vmem:[%s2 + $0x38] sm:$0xff]
    %v315 = vld [vmem:[%s2 + $0x40] sm:$0xff]
    %v316 = vld [vmem:[%s2 + $0x48] sm:$0xff]
    %v317 = vld [vmem:[%s2 + $0x50] sm:$0xff]
    %v318 = vld [vmem:[%s2 + $0x58] sm:$0xff]
    %v319 = vld [vmem:[%s2 + $0x60] sm:$0xff]
    %v320 = vld [vmem:[%s2 + $0x68] sm:$0xff]
    %v321 = vld [vmem:[%s2 + $0x70] sm:$0xff]
    %v322 = vld [vmem:[%s2 + $0x78] sm:$0xff]
    %v323 = vpack.c.bf16 %v308, %v307
    %v324 = vpack.c.bf16 %v310, %v309
    %v325 = vpack.c.bf16 %v312, %v311
    %v326 = vpack.c.bf16 %v314, %v313
    %v327 = vpack.c.bf16 %v316, %v315
    %v328 = vpack.c.bf16 %v318, %v317
    %v329 = vpack.c.bf16 %v320, %v319
    %v330 = vpack.c.bf16 %v322, %v321
    %331 = vmatpush.bf16.msra.mxu0 %v330
    %332 = vmatpush.bf16.msra.mxu0 %v329
    %333 = vmatpush.bf16.msra.mxu0 %v328
    %334 = vmatpush.bf16.msra.mxu0 %v327
    %335 = vmatpush.bf16.msra.mxu0 %v326
    %336 = vmatpush.bf16.msra.mxu0 %v325
    %337 = vmatpush.bf16.msra.mxu0 %v324
    %338 = vmatpush.bf16.msra.mxu0 %v323
    %339 = vmatmul.bf16.gmra.mxu0 %v299
    %v340 = vpop.f32.mrf.mxu0
    %v341 = vadd.f32 0.0, %v340
    %v342 = vpop.f32.mrf.mxu0
    %v343 = vadd.f32 0.0, %v342
    %344 = vmatmul.bf16.gmra.mxu0 %v300
    %v345 = vpop.f32.mrf.mxu0
    %v346 = vadd.f32 0.0, %v345
    %v347 = vpop.f32.mrf.mxu0
    %v348 = vadd.f32 0.0, %v347
    %349 = vmatmul.bf16.gmra.mxu0 %v301
    %v350 = vpop.f32.mrf.mxu0
    %v351 = vadd.f32 0.0, %v350
    %v352 = vpop.f32.mrf.mxu0
    %v353 = vadd.f32 0.0, %v352
    %354 = vmatmul.bf16.gmra.mxu0 %v302
    %v355 = vpop.f32.mrf.mxu0
    %v356 = vadd.f32 0.0, %v355
    %v357 = vpop.f32.mrf.mxu0
    %v358 = vadd.f32 0.0, %v357
    %359 = vmatmul.bf16.gmra.mxu0 %v303
    %v360 = vpop.f32.mrf.mxu0
    %v361 = vadd.f32 0.0, %v360
    %v362 = vpop.f32.mrf.mxu0
    %v363 = vadd.f32 0.0, %v362
    %364 = vmatmul.bf16.gmra.mxu0 %v304
    %v365 = vpop.f32.mrf.mxu0
    %v366 = vadd.f32 0.0, %v365
    %v367 = vpop.f32.mrf.mxu0
    %v368 = vadd.f32 0.0, %v367
    %369 = vmatmul.bf16.gmra.mxu0 %v305
    %v370 = vpop.f32.mrf.mxu0
    %v371 = vadd.f32 0.0, %v370
    %v372 = vpop.f32.mrf.mxu0
    %v373 = vadd.f32 0.0, %v372
    %374 = vmatmul.bf16.gmra.mxu0 %v306
    %v375 = vpop.f32.mrf.mxu0
    %v376 = vadd.f32 0.0, %v375
    %v377 = vpop.f32.mrf.mxu0
    %v378 = vadd.f32 0.0, %v377
    %379 = vdwg.mxu0
    %v380 = vpack.c.bf16 %v343, %v341
    %v381 = vpack.c.bf16 %v348, %v346
    %v382 = vpack.c.bf16 %v353, %v351
    %v383 = vpack.c.bf16 %v358, %v356
    %v384 = vpack.c.bf16 %v363, %v361
    %v385 = vpack.c.bf16 %v368, %v366
    %v386 = vpack.c.bf16 %v373, %v371
    %v387 = vpack.c.bf16 %v378, %v376
    %v388 = vld [vmem:[%s3] sm:$0xf]
    %v389 = vld [vmem:[%s3 + $0x4] sm:$0xf]
    %v390 = vld [vmem:[%s3 + $0x8] sm:$0xf]
    %v391 = vld [vmem:[%s3 + $0xc] sm:$0xf]
    %v392 = vld [vmem:[%s3 + $0x10] sm:$0xf]
    %v393 = vld [vmem:[%s3 + $0x14] sm:$0xf]
    %v394 = vld [vmem:[%s3 + $0x18] sm:$0xf]
    %v395 = vld [vmem:[%s3 + $0x1c] sm:$0xf]
    %v396 = vld [vmem:[%s3 + $0x20] sm:$0xf]
    %v397 = vld [vmem:[%s3 + $0x24] sm:$0xf]
    %v398 = vld [vmem:[%s3 + $0x28] sm:$0xf]
    %v399 = vld [vmem:[%s3 + $0x2c] sm:$0xf]
    %v400 = vld [vmem:[%s3 + $0x30] sm:$0xf]
    %v401 = vld [vmem:[%s3 + $0x34] sm:$0xf]
    %v402 = vld [vmem:[%s3 + $0x38] sm:$0xf]
    %v403 = vld [vmem:[%s3 + $0x3c] sm:$0xf]
    %v404 = vld [vmem:[%s4] sm:$0x1]
    %v406 = vperm.slane %v404, 0
    %v424 = vunpack.c.l.b16 %v388
    %v425 = vunpack.c.l.b16 %v389
    %v426 = vunpack.c.l.b16 %v390
    %v427 = vunpack.c.l.b16 %v391
    %v428 = vunpack.c.l.b16 %v392
    %v429 = vunpack.c.l.b16 %v393
    %v430 = vunpack.c.l.b16 %v394
    %v431 = vunpack.c.l.b16 %v395
    %v432 = vunpack.c.l.b16 %v396
    %v433 = vunpack.c.l.b16 %v397
    %v434 = vunpack.c.l.b16 %v398
    %v435 = vunpack.c.l.b16 %v399
    %v436 = vunpack.c.l.b16 %v400
    %v437 = vunpack.c.l.b16 %v401
    %v438 = vunpack.c.l.b16 %v402
    %v439 = vunpack.c.l.b16 %v403
    %v440 = vpack.c.b16 %v425, %v424
    %v441 = vpack.c.b16 %v427, %v426
    %v442 = vpack.c.b16 %v429, %v428
    %v443 = vpack.c.b16 %v431, %v430
    %v444 = vpack.c.b16 %v433, %v432
    %v445 = vpack.c.b16 %v435, %v434
    %v446 = vpack.c.b16 %v437, %v436
    %v447 = vpack.c.b16 %v439, %v438
    %456 = vmatpush.bf16.msra.mxu0 %v447
    %457 = vmatpush.bf16.msra.mxu0 %v446
    %458 = vmatpush.bf16.msra.mxu0 %v445
    %459 = vmatpush.bf16.msra.mxu0 %v444
    %460 = vmatpush.bf16.msra.mxu0 %v443
    %461 = vmatpush.bf16.msra.mxu0 %v442
    %462 = vmatpush.bf16.msra.mxu0 %v441
    %463 = vmatpush.bf16.msra.mxu0 %v440
    %464 = vmatmul.bf16.gmra.mxu0 %v380
    %v465 = vpop.f32.mrf.mxu0
    %v466 = vadd.f32 %v406, %v465
    %v467 = vpop.f32.mrf.mxu0
    %v468 = vadd.f32 %v406, %v467
    %469 = vmatmul.bf16.gmra.mxu0 %v381
    %v470 = vpop.f32.mrf.mxu0
    %v471 = vadd.f32 %v406, %v470
    %v472 = vpop.f32.mrf.mxu0
    %v473 = vadd.f32 %v406, %v472
    %474 = vmatmul.bf16.gmra.mxu0 %v382
    %v475 = vpop.f32.mrf.mxu0
    %v476 = vadd.f32 %v406, %v475
    %v477 = vpop.f32.mrf.mxu0
    %v478 = vadd.f32 %v406, %v477
    %479 = vmatmul.bf16.gmra.mxu0 %v383
    %v480 = vpop.f32.mrf.mxu0
    %v481 = vadd.f32 %v406, %v480
    %v482 = vpop.f32.mrf.mxu0
    %v483 = vadd.f32 %v406, %v482
    %484 = vmatmul.bf16.gmra.mxu0 %v384
    %v485 = vpop.f32.mrf.mxu0
    %v486 = vadd.f32 %v406, %v485
    %v487 = vpop.f32.mrf.mxu0
    %v488 = vadd.f32 %v406, %v487
    %489 = vmatmul.bf16.gmra.mxu0 %v385
    %v490 = vpop.f32.mrf.mxu0
    %v491 = vadd.f32 %v406, %v490
    %v492 = vpop.f32.mrf.mxu0
    %v493 = vadd.f32 %v406, %v492
    %494 = vmatmul.bf16.gmra.mxu0 %v386
    %v495 = vpop.f32.mrf.mxu0
    %v496 = vadd.f32 %v406, %v495
    %v497 = vpop.f32.mrf.mxu0
    %v498 = vadd.f32 %v406, %v497
    %499 = vmatmul.bf16.gmra.mxu0 %v387
    %v500 = vpop.f32.mrf.mxu0
    %v501 = vadd.f32 %v406, %v500
    %v502 = vpop.f32.mrf.mxu0
    %v503 = vadd.f32 %v406, %v502
    %504 = vdwg.mxu0
    %v505 = vmax.f32 %v466, 0.0
    %v506 = vmax.f32 %v468, 0.0
    %v507 = vmax.f32 %v471, 0.0
    %v508 = vmax.f32 %v473, 0.0
    %v509 = vmax.f32 %v476, 0.0
    %v510 = vmax.f32 %v478, 0.0
    %v511 = vmax.f32 %v481, 0.0
    %v512 = vmax.f32 %v483, 0.0
    %v513 = vmax.f32 %v486, 0.0
    %v514 = vmax.f32 %v488, 0.0
    %v515 = vmax.f32 %v491, 0.0
    %v516 = vmax.f32 %v493, 0.0
    %v517 = vmax.f32 %v496, 0.0
    %v518 = vmax.f32 %v498, 0.0
    %v519 = vmax.f32 %v501, 0.0
    %v520 = vmax.f32 %v503, 0.0
    %v521 = vpack.c.bf16 %v506, %v505
    %v522 = vpack.c.bf16 %v508, %v507
    %v523 = vpack.c.bf16 %v510, %v509
    %v524 = vpack.c.bf16 %v512, %v511
    %v525 = vpack.c.bf16 %v514, %v513
    %v526 = vpack.c.bf16 %v516, %v515
    %v527 = vpack.c.bf16 %v518, %v517
    %v528 = vpack.c.bf16 %v520, %v519
    %v529 = vld [vmem:[%s5] sm:$0xf]
    %v530 = vld [vmem:[%s5 + $0x4] sm:$0xf]
    %v531 = vld [vmem:[%s5 + $0x8] sm:$0xf]
    %v532 = vld [vmem:[%s5 + $0xc] sm:$0xf]
    %v533 = vld [vmem:[%s5 + $0x10] sm:$0xf]
    %v534 = vld [vmem:[%s5 + $0x14] sm:$0xf]
    %v535 = vld [vmem:[%s5 + $0x18] sm:$0xf]
    %v536 = vld [vmem:[%s5 + $0x1c] sm:$0xf]
    %v537 = vld [vmem:[%s5 + $0x20] sm:$0xf]
    %v538 = vld [vmem:[%s5 + $0x24] sm:$0xf]
    %v539 = vld [vmem:[%s5 + $0x28] sm:$0xf]
    %v540 = vld [vmem:[%s5 + $0x2c] sm:$0xf]
    %v541 = vld [vmem:[%s5 + $0x30] sm:$0xf]
    %v542 = vld [vmem:[%s5 + $0x34] sm:$0xf]
    %v543 = vld [vmem:[%s5 + $0x38] sm:$0xf]
    %v544 = vld [vmem:[%s5 + $0x3c] sm:$0xf]
    %v545 = vld [vmem:[%s6] sm:$0x1]
    %v547 = vperm.slane %v545, 0
    %v565 = vunpack.c.l.b16 %v529
    %v566 = vunpack.c.l.b16 %v530
    %v567 = vunpack.c.l.b16 %v531
    %v568 = vunpack.c.l.b16 %v532
    %v569 = vunpack.c.l.b16 %v533
    %v570 = vunpack.c.l.b16 %v534
    %v571 = vunpack.c.l.b16 %v535
    %v572 = vunpack.c.l.b16 %v536
    %v573 = vunpack.c.l.b16 %v537
    %v574 = vunpack.c.l.b16 %v538
    %v575 = vunpack.c.l.b16 %v539
    %v576 = vunpack.c.l.b16 %v540
    %v577 = vunpack.c.l.b16 %v541
    %v578 = vunpack.c.l.b16 %v542
    %v579 = vunpack.c.l.b16 %v543
    %v580 = vunpack.c.l.b16 %v544
    %v581 = vpack.c.b16 %v566, %v565
    %v582 = vpack.c.b16 %v568, %v567
    %v583 = vpack.c.b16 %v570, %v569
    %v584 = vpack.c.b16 %v572, %v571
    %v585 = vpack.c.b16 %v574, %v573
    %v586 = vpack.c.b16 %v576, %v575
    %v587 = vpack.c.b16 %v578, %v577
    %v588 = vpack.c.b16 %v580, %v579
    %597 = vmatpush.bf16.msra.mxu0 %v588
    %598 = vmatpush.bf16.msra.mxu0 %v587
    %599 = vmatpush.bf16.msra.mxu0 %v586
    %600 = vmatpush.bf16.msra.mxu0 %v585
    %601 = vmatpush.bf16.msra.mxu0 %v584
    %602 = vmatpush.bf16.msra.mxu0 %v583
    %603 = vmatpush.bf16.msra.mxu0 %v582
    %604 = vmatpush.bf16.msra.mxu0 %v581
    %605 = vmatmul.bf16.gmra.mxu0 %v521
    %v606 = vpop.f32.mrf.mxu0
    %v607 = vadd.f32 %v547, %v606
    %v608 = vpop.f32.mrf.mxu0
    %v609 = vadd.f32 %v547, %v608
    %610 = vmatmul.bf16.gmra.mxu0 %v522
    %v611 = vpop.f32.mrf.mxu0
    %v612 = vadd.f32 %v547, %v611
    %v613 = vpop.f32.mrf.mxu0
    %v614 = vadd.f32 %v547, %v613
    %615 = vmatmul.bf16.gmra.mxu0 %v523
    %v616 = vpop.f32.mrf.mxu0
    %v617 = vadd.f32 %v547, %v616
    %v618 = vpop.f32.mrf.mxu0
    %v619 = vadd.f32 %v547, %v618
    %620 = vmatmul.bf16.gmra.mxu0 %v524
    %v621 = vpop.f32.mrf.mxu0
    %v622 = vadd.f32 %v547, %v621
    %v623 = vpop.f32.mrf.mxu0
    %v624 = vadd.f32 %v547, %v623
    %625 = vmatmul.bf16.gmra.mxu0 %v525
    %v626 = vpop.f32.mrf.mxu0
    %v627 = vadd.f32 %v547, %v626
    %v628 = vpop.f32.mrf.mxu0
    %v629 = vadd.f32 %v547, %v628
    %630 = vmatmul.bf16.gmra.mxu0 %v526
    %v631 = vpop.f32.mrf.mxu0
    %v632 = vadd.f32 %v547, %v631
    %v633 = vpop.f32.mrf.mxu0
    %v634 = vadd.f32 %v547, %v633
    %635 = vmatmul.bf16.gmra.mxu0 %v527
    %v636 = vpop.f32.mrf.mxu0
    %v637 = vadd.f32 %v547, %v636
    %v638 = vpop.f32.mrf.mxu0
    %v639 = vadd.f32 %v547, %v638
    %640 = vmatmul.bf16.gmra.mxu0 %v528
    %v641 = vpop.f32.mrf.mxu0
    %v642 = vadd.f32 %v547, %v641
    %v643 = vpop.f32.mrf.mxu0
    %v644 = vadd.f32 %v547, %v643
    %645 = vdwg.mxu0
    %v646 = vmax.f32 %v607, 0.0
    %v647 = vmax.f32 %v609, 0.0
    %v648 = vmax.f32 %v612, 0.0
    %v649 = vmax.f32 %v614, 0.0
    %v650 = vmax.f32 %v617, 0.0
    %v651 = vmax.f32 %v619, 0.0
    %v652 = vmax.f32 %v622, 0.0
    %v653 = vmax.f32 %v624, 0.0
    %v654 = vmax.f32 %v627, 0.0
    %v655 = vmax.f32 %v629, 0.0
    %v656 = vmax.f32 %v632, 0.0
    %v657 = vmax.f32 %v634, 0.0
    %v658 = vmax.f32 %v637, 0.0
    %v659 = vmax.f32 %v639, 0.0
    %v660 = vmax.f32 %v642, 0.0
    %v661 = vmax.f32 %v644, 0.0
    %v662 = vpack.c.bf16 %v647, %v646
    %v663 = vpack.c.bf16 %v649, %v648
    %v664 = vpack.c.bf16 %v651, %v650
    %v665 = vpack.c.bf16 %v653, %v652
    %v666 = vpack.c.bf16 %v655, %v654
    %v667 = vpack.c.bf16 %v657, %v656
    %v668 = vpack.c.bf16 %v659, %v658
    %v669 = vpack.c.bf16 %v661, %v660
    %670 = vmatpush.bf16.msra.mxu0 %v669
    %671 = vmatpush.bf16.msra.mxu0 %v668
    %672 = vmatpush.bf16.msra.mxu0 %v667
    %673 = vmatpush.bf16.msra.mxu0 %v666
    %674 = vmatpush.bf16.msra.mxu0 %v665
    %675 = vmatpush.bf16.msra.mxu0 %v664
    %676 = vmatpush.bf16.msra.mxu0 %v663
    %677 = vmatpush.bf16.msra.mxu0 %v662
    %678 = vmatmul.bf16.gmra.mxu0 %v299
    %v679 = vpop.f32.mrf.mxu0
    %v680 = vadd.f32 0.0, %v679
    %v681 = vpop.f32.mrf.mxu0
    %v682 = vadd.f32 0.0, %v681
    %683 = vmatmul.bf16.gmra.mxu0 %v300
    %v684 = vpop.f32.mrf.mxu0
    %v685 = vadd.f32 0.0, %v684
    %v686 = vpop.f32.mrf.mxu0
    %v687 = vadd.f32 0.0, %v686
    %688 = vmatmul.bf16.gmra.mxu0 %v301
    %v689 = vpop.f32.mrf.mxu0
    %v690 = vadd.f32 0.0, %v689
    %v691 = vpop.f32.mrf.mxu0
    %v692 = vadd.f32 0.0, %v691
    %693 = vmatmul.bf16.gmra.mxu0 %v302
    %v694 = vpop.f32.mrf.mxu0
    %v695 = vadd.f32 0.0, %v694
    %v696 = vpop.f32.mrf.mxu0
    %v697 = vadd.f32 0.0, %v696
    %698 = vmatmul.bf16.gmra.mxu0 %v303
    %v699 = vpop.f32.mrf.mxu0
    %v700 = vadd.f32 0.0, %v699
    %v701 = vpop.f32.mrf.mxu0
    %v702 = vadd.f32 0.0, %v701
    %703 = vmatmul.bf16.gmra.mxu0 %v304
    %v704 = vpop.f32.mrf.mxu0
    %v705 = vadd.f32 0.0, %v704
    %v706 = vpop.f32.mrf.mxu0
    %v707 = vadd.f32 0.0, %v706
    %708 = vmatmul.bf16.gmra.mxu0 %v305
    %v709 = vpop.f32.mrf.mxu0
    %v710 = vadd.f32 0.0, %v709
    %v711 = vpop.f32.mrf.mxu0
    %v712 = vadd.f32 0.0, %v711
    %713 = vmatmul.bf16.gmra.mxu0 %v306
    %v714 = vpop.f32.mrf.mxu0
    %v715 = vadd.f32 0.0, %v714
    %v716 = vpop.f32.mrf.mxu0
    %v717 = vadd.f32 0.0, %v716
    %718 = vdwg.mxu0
    %v719 = vpack.c.bf16 %v682, %v680
    %v720 = vpack.c.bf16 %v687, %v685
    %v721 = vpack.c.bf16 %v692, %v690
    %v722 = vpack.c.bf16 %v697, %v695
    %v723 = vpack.c.bf16 %v702, %v700
    %v724 = vpack.c.bf16 %v707, %v705
    %v725 = vpack.c.bf16 %v712, %v710
    %v726 = vpack.c.bf16 %v717, %v715
    %v727 = vld [vmem:[%s7] sm:$0xf]
    %v728 = vld [vmem:[%s7 + $0x4] sm:$0xf]
    %v729 = vld [vmem:[%s7 + $0x8] sm:$0xf]
    %v730 = vld [vmem:[%s7 + $0xc] sm:$0xf]
    %v731 = vld [vmem:[%s7 + $0x10] sm:$0xf]
    %v732 = vld [vmem:[%s7 + $0x14] sm:$0xf]
    %v733 = vld [vmem:[%s7 + $0x18] sm:$0xf]
    %v734 = vld [vmem:[%s7 + $0x1c] sm:$0xf]
    %v735 = vld [vmem:[%s7 + $0x20] sm:$0xf]
    %v736 = vld [vmem:[%s7 + $0x24] sm:$0xf]
    %v737 = vld [vmem:[%s7 + $0x28] sm:$0xf]
    %v738 = vld [vmem:[%s7 + $0x2c] sm:$0xf]
    %v739 = vld [vmem:[%s7 + $0x30] sm:$0xf]
    %v740 = vld [vmem:[%s7 + $0x34] sm:$0xf]
    %v741 = vld [vmem:[%s7 + $0x38] sm:$0xf]
    %v742 = vld [vmem:[%s7 + $0x3c] sm:$0xf]
    %v743 = vld [vmem:[%s8] sm:$0x1]
    %v745 = vperm.slane %v743, 0
    %v763 = vunpack.c.l.b16 %v727
    %v764 = vunpack.c.l.b16 %v728
    %v765 = vunpack.c.l.b16 %v729
    %v766 = vunpack.c.l.b16 %v730
    %v767 = vunpack.c.l.b16 %v731
    %v768 = vunpack.c.l.b16 %v732
    %v769 = vunpack.c.l.b16 %v733
    %v770 = vunpack.c.l.b16 %v734
    %v771 = vunpack.c.l.b16 %v735
    %v772 = vunpack.c.l.b16 %v736
    %v773 = vunpack.c.l.b16 %v737
    %v774 = vunpack.c.l.b16 %v738
    %v775 = vunpack.c.l.b16 %v739
    %v776 = vunpack.c.l.b16 %v740
    %v777 = vunpack.c.l.b16 %v741
    %v778 = vunpack.c.l.b16 %v742
    %v779 = vpack.c.b16 %v764, %v763
    %v780 = vpack.c.b16 %v766, %v765
    %v781 = vpack.c.b16 %v768, %v767
    %v782 = vpack.c.b16 %v770, %v769
    %v783 = vpack.c.b16 %v772, %v771
    %v784 = vpack.c.b16 %v774, %v773
    %v785 = vpack.c.b16 %v776, %v775
    %v786 = vpack.c.b16 %v778, %v777
    %795 = vmatpush.bf16.msra.mxu0 %v786
    %796 = vmatpush.bf16.msra.mxu0 %v785
    %797 = vmatpush.bf16.msra.mxu0 %v784
    %798 = vmatpush.bf16.msra.mxu0 %v783
    %799 = vmatpush.bf16.msra.mxu0 %v782
    %800 = vmatpush.bf16.msra.mxu0 %v781
    %801 = vmatpush.bf16.msra.mxu0 %v780
    %802 = vmatpush.bf16.msra.mxu0 %v779
    %803 = vmatmul.bf16.gmra.mxu0 %v719
    %v804 = vpop.f32.mrf.mxu0
    %v805 = vadd.f32 %v745, %v804
    %v806 = vpop.f32.mrf.mxu0
    %v807 = vadd.f32 %v745, %v806
    %808 = vmatmul.bf16.gmra.mxu0 %v720
    %v809 = vpop.f32.mrf.mxu0
    %v810 = vadd.f32 %v745, %v809
    %v811 = vpop.f32.mrf.mxu0
    %v812 = vadd.f32 %v745, %v811
    %813 = vmatmul.bf16.gmra.mxu0 %v721
    %v814 = vpop.f32.mrf.mxu0
    %v815 = vadd.f32 %v745, %v814
    %v816 = vpop.f32.mrf.mxu0
    %v817 = vadd.f32 %v745, %v816
    %818 = vmatmul.bf16.gmra.mxu0 %v722
    %v819 = vpop.f32.mrf.mxu0
    %v820 = vadd.f32 %v745, %v819
    %v821 = vpop.f32.mrf.mxu0
    %v822 = vadd.f32 %v745, %v821
    %823 = vmatmul.bf16.gmra.mxu0 %v723
    %v824 = vpop.f32.mrf.mxu0
    %v825 = vadd.f32 %v745, %v824
    %v826 = vpop.f32.mrf.mxu0
    %v827 = vadd.f32 %v745, %v826
    %828 = vmatmul.bf16.gmra.mxu0 %v724
    %v829 = vpop.f32.mrf.mxu0
    %v830 = vadd.f32 %v745, %v829
    %v831 = vpop.f32.mrf.mxu0
    %v832 = vadd.f32 %v745, %v831
    %833 = vmatmul.bf16.gmra.mxu0 %v725
    %v834 = vpop.f32.mrf.mxu0
    %v835 = vadd.f32 %v745, %v834
    %v836 = vpop.f32.mrf.mxu0
    %v837 = vadd.f32 %v745, %v836
    %838 = vmatmul.bf16.gmra.mxu0 %v726
    %v839 = vpop.f32.mrf.mxu0
    %v840 = vadd.f32 %v745, %v839
    %v841 = vpop.f32.mrf.mxu0
    %v842 = vadd.f32 %v745, %v841
    %843 = vdwg.mxu0
    %v844 = vmax.f32 %v805, 0.0
    %v845 = vmax.f32 %v807, 0.0
    %v846 = vmax.f32 %v810, 0.0
    %v847 = vmax.f32 %v812, 0.0
    %v848 = vmax.f32 %v815, 0.0
    %v849 = vmax.f32 %v817, 0.0
    %v850 = vmax.f32 %v820, 0.0
    %v851 = vmax.f32 %v822, 0.0
    %v852 = vmax.f32 %v825, 0.0
    %v853 = vmax.f32 %v827, 0.0
    %v854 = vmax.f32 %v830, 0.0
    %v855 = vmax.f32 %v832, 0.0
    %v856 = vmax.f32 %v835, 0.0
    %v857 = vmax.f32 %v837, 0.0
    %v858 = vmax.f32 %v840, 0.0
    %v859 = vmax.f32 %v842, 0.0
    %v860 = vpack.c.bf16 %v845, %v844
    %v861 = vpack.c.bf16 %v847, %v846
    %v862 = vpack.c.bf16 %v849, %v848
    %v863 = vpack.c.bf16 %v851, %v850
    %v864 = vpack.c.bf16 %v853, %v852
    %v865 = vpack.c.bf16 %v855, %v854
    %v866 = vpack.c.bf16 %v857, %v856
    %v867 = vpack.c.bf16 %v859, %v858
    %v868 = vld [vmem:[%s9] sm:$0xf]
    %v869 = vld [vmem:[%s9 + $0x4] sm:$0xf]
    %v870 = vld [vmem:[%s9 + $0x8] sm:$0xf]
    %v871 = vld [vmem:[%s9 + $0xc] sm:$0xf]
    %v872 = vld [vmem:[%s9 + $0x10] sm:$0xf]
    %v873 = vld [vmem:[%s9 + $0x14] sm:$0xf]
    %v874 = vld [vmem:[%s9 + $0x18] sm:$0xf]
    %v875 = vld [vmem:[%s9 + $0x1c] sm:$0xf]
    %v876 = vld [vmem:[%s9 + $0x20] sm:$0xf]
    %v877 = vld [vmem:[%s9 + $0x24] sm:$0xf]
    %v878 = vld [vmem:[%s9 + $0x28] sm:$0xf]
    %v879 = vld [vmem:[%s9 + $0x2c] sm:$0xf]
    %v880 = vld [vmem:[%s9 + $0x30] sm:$0xf]
    %v881 = vld [vmem:[%s9 + $0x34] sm:$0xf]
    %v882 = vld [vmem:[%s9 + $0x38] sm:$0xf]
    %v883 = vld [vmem:[%s9 + $0x3c] sm:$0xf]
    %v884 = vld [vmem:[%s10] sm:$0x1]
    %v886 = vperm.slane %v884, 0
    %v904 = vunpack.c.l.b16 %v868
    %v905 = vunpack.c.l.b16 %v869
    %v906 = vunpack.c.l.b16 %v870
    %v907 = vunpack.c.l.b16 %v871
    %v908 = vunpack.c.l.b16 %v872
    %v909 = vunpack.c.l.b16 %v873
    %v910 = vunpack.c.l.b16 %v874
    %v911 = vunpack.c.l.b16 %v875
    %v912 = vunpack.c.l.b16 %v876
    %v913 = vunpack.c.l.b16 %v877
    %v914 = vunpack.c.l.b16 %v878
    %v915 = vunpack.c.l.b16 %v879
    %v916 = vunpack.c.l.b16 %v880
    %v917 = vunpack.c.l.b16 %v881
    %v918 = vunpack.c.l.b16 %v882
    %v919 = vunpack.c.l.b16 %v883
    %v920 = vpack.c.b16 %v905, %v904
    %v921 = vpack.c.b16 %v907, %v906
    %v922 = vpack.c.b16 %v909, %v908
    %v923 = vpack.c.b16 %v911, %v910
    %v924 = vpack.c.b16 %v913, %v912
    %v925 = vpack.c.b16 %v915, %v914
    %v926 = vpack.c.b16 %v917, %v916
    %v927 = vpack.c.b16 %v919, %v918
    %936 = vmatpush.bf16.msra.mxu0 %v927
    %937 = vmatpush.bf16.msra.mxu0 %v926
    %938 = vmatpush.bf16.msra.mxu0 %v925
    %939 = vmatpush.bf16.msra.mxu0 %v924
    %940 = vmatpush.bf16.msra.mxu0 %v923
    %941 = vmatpush.bf16.msra.mxu0 %v922
    %942 = vmatpush.bf16.msra.mxu0 %v921
    %943 = vmatpush.bf16.msra.mxu0 %v920
    %944 = vmatmul.bf16.gmra.mxu0 %v860
    %v945 = vpop.f32.mrf.mxu0
    %v946 = vadd.f32 %v886, %v945
    %v947 = vpop.f32.mrf.mxu0
    %v948 = vadd.f32 %v886, %v947
    %949 = vmatmul.bf16.gmra.mxu0 %v861
    %v950 = vpop.f32.mrf.mxu0
    %v951 = vadd.f32 %v886, %v950
    %v952 = vpop.f32.mrf.mxu0
    %v953 = vadd.f32 %v886, %v952
    %954 = vmatmul.bf16.gmra.mxu0 %v862
    %v955 = vpop.f32.mrf.mxu0
    %v956 = vadd.f32 %v886, %v955
    %v957 = vpop.f32.mrf.mxu0
    %v958 = vadd.f32 %v886, %v957
    %959 = vmatmul.bf16.gmra.mxu0 %v863
    %v960 = vpop.f32.mrf.mxu0
    %v961 = vadd.f32 %v886, %v960
    %v962 = vpop.f32.mrf.mxu0
    %v963 = vadd.f32 %v886, %v962
    %964 = vmatmul.bf16.gmra.mxu0 %v864
    %v965 = vpop.f32.mrf.mxu0
    %v966 = vadd.f32 %v886, %v965
    %v967 = vpop.f32.mrf.mxu0
    %v968 = vadd.f32 %v886, %v967
    %969 = vmatmul.bf16.gmra.mxu0 %v865
    %v970 = vpop.f32.mrf.mxu0
    %v971 = vadd.f32 %v886, %v970
    %v972 = vpop.f32.mrf.mxu0
    %v973 = vadd.f32 %v886, %v972
    %974 = vmatmul.bf16.gmra.mxu0 %v866
    %v975 = vpop.f32.mrf.mxu0
    %v976 = vadd.f32 %v886, %v975
    %v977 = vpop.f32.mrf.mxu0
    %v978 = vadd.f32 %v886, %v977
    %979 = vmatmul.bf16.gmra.mxu0 %v867
    %v980 = vpop.f32.mrf.mxu0
    %v981 = vadd.f32 %v886, %v980
    %v982 = vpop.f32.mrf.mxu0
    %v983 = vadd.f32 %v886, %v982
    %984 = vdwg.mxu0
    %v985 = vmax.f32 %v946, 0.0
    %v986 = vmax.f32 %v948, 0.0
    %v987 = vmax.f32 %v951, 0.0
    %v988 = vmax.f32 %v953, 0.0
    %v989 = vmax.f32 %v956, 0.0
    %v990 = vmax.f32 %v958, 0.0
    %v991 = vmax.f32 %v961, 0.0
    %v992 = vmax.f32 %v963, 0.0
    %v993 = vmax.f32 %v966, 0.0
    %v994 = vmax.f32 %v968, 0.0
    %v995 = vmax.f32 %v971, 0.0
    %v996 = vmax.f32 %v973, 0.0
    %v997 = vmax.f32 %v976, 0.0
    %v998 = vmax.f32 %v978, 0.0
    %v999 = vmax.f32 %v981, 0.0
    %v1000 = vmax.f32 %v983, 0.0
    %v1001 = vpack.c.bf16 %v986, %v985
    %v1002 = vpack.c.bf16 %v988, %v987
    %v1003 = vpack.c.bf16 %v990, %v989
    %v1004 = vpack.c.bf16 %v992, %v991
    %v1005 = vpack.c.bf16 %v994, %v993
    %v1006 = vpack.c.bf16 %v996, %v995
    %v1007 = vpack.c.bf16 %v998, %v997
    %v1008 = vpack.c.bf16 %v1000, %v999
    %1009 = vmatpush.bf16.msra.mxu0 %v1008
    %1010 = vmatpush.bf16.msra.mxu0 %v1007
    %1011 = vmatpush.bf16.msra.mxu0 %v1006
    %1012 = vmatpush.bf16.msra.mxu0 %v1005
    %1013 = vmatpush.bf16.msra.mxu0 %v1004
    %1014 = vmatpush.bf16.msra.mxu0 %v1003
    %1015 = vmatpush.bf16.msra.mxu0 %v1002
    %1016 = vmatpush.bf16.msra.mxu0 %v1001
    %1017 = vmatmul.bf16.gmra.mxu0 %v299
    %v1018 = vpop.f32.mrf.mxu0
    %v1019 = vadd.f32 0.0, %v1018
    %v1020 = vpop.f32.mrf.mxu0
    %v1021 = vadd.f32 0.0, %v1020
    %1022 = vmatmul.bf16.gmra.mxu0 %v300
    %v1023 = vpop.f32.mrf.mxu0
    %v1024 = vadd.f32 0.0, %v1023
    %v1025 = vpop.f32.mrf.mxu0
    %v1026 = vadd.f32 0.0, %v1025
    %1027 = vmatmul.bf16.gmra.mxu0 %v301
    %v1028 = vpop.f32.mrf.mxu0
    %v1029 = vadd.f32 0.0, %v1028
    %v1030 = vpop.f32.mrf.mxu0
    %v1031 = vadd.f32 0.0, %v1030
    %1032 = vmatmul.bf16.gmra.mxu0 %v302
    %v1033 = vpop.f32.mrf.mxu0
    %v1034 = vadd.f32 0.0, %v1033
    %v1035 = vpop.f32.mrf.mxu0
    %v1036 = vadd.f32 0.0, %v1035
    %1037 = vmatmul.bf16.gmra.mxu0 %v303
    %v1038 = vpop.f32.mrf.mxu0
    %v1039 = vadd.f32 0.0, %v1038
    %v1040 = vpop.f32.mrf.mxu0
    %v1041 = vadd.f32 0.0, %v1040
    %1042 = vmatmul.bf16.gmra.mxu0 %v304
    %v1043 = vpop.f32.mrf.mxu0
    %v1044 = vadd.f32 0.0, %v1043
    %v1045 = vpop.f32.mrf.mxu0
    %v1046 = vadd.f32 0.0, %v1045
    %1047 = vmatmul.bf16.gmra.mxu0 %v305
    %v1048 = vpop.f32.mrf.mxu0
    %v1049 = vadd.f32 0.0, %v1048
    %v1050 = vpop.f32.mrf.mxu0
    %v1051 = vadd.f32 0.0, %v1050
    %1052 = vmatmul.bf16.gmra.mxu0 %v306
    %v1053 = vpop.f32.mrf.mxu0
    %v1054 = vadd.f32 0.0, %v1053
    %v1055 = vpop.f32.mrf.mxu0
    %v1056 = vadd.f32 0.0, %v1055
    %1057 = vdwg.mxu0
    %v1058 = vpack.c.bf16 %v1021, %v1019
    %v1059 = vpack.c.bf16 %v1026, %v1024
    %v1060 = vpack.c.bf16 %v1031, %v1029
    %v1061 = vpack.c.bf16 %v1036, %v1034
    %v1062 = vpack.c.bf16 %v1041, %v1039
    %v1063 = vpack.c.bf16 %v1046, %v1044
    %v1064 = vpack.c.bf16 %v1051, %v1049
    %v1065 = vpack.c.bf16 %v1056, %v1054
    %v1066 = vld [vmem:[%s11] sm:$0xf]
    %v1067 = vld [vmem:[%s11 + $0x4] sm:$0xf]
    %v1068 = vld [vmem:[%s11 + $0x8] sm:$0xf]
    %v1069 = vld [vmem:[%s11 + $0xc] sm:$0xf]
    %v1070 = vld [vmem:[%s11 + $0x10] sm:$0xf]
    %v1071 = vld [vmem:[%s11 + $0x14] sm:$0xf]
    %v1072 = vld [vmem:[%s11 + $0x18] sm:$0xf]
    %v1073 = vld [vmem:[%s11 + $0x1c] sm:$0xf]
    %v1074 = vld [vmem:[%s11 + $0x20] sm:$0xf]
    %v1075 = vld [vmem:[%s11 + $0x24] sm:$0xf]
    %v1076 = vld [vmem:[%s11 + $0x28] sm:$0xf]
    %v1077 = vld [vmem:[%s11 + $0x2c] sm:$0xf]
    %v1078 = vld [vmem:[%s11 + $0x30] sm:$0xf]
    %v1079 = vld [vmem:[%s11 + $0x34] sm:$0xf]
    %v1080 = vld [vmem:[%s11 + $0x38] sm:$0xf]
    %v1081 = vld [vmem:[%s11 + $0x3c] sm:$0xf]
    %v1082 = vld [vmem:[%s12] sm:$0x1]
    %v1084 = vperm.slane %v1082, 0
    %v1102 = vunpack.c.l.b16 %v1066
    %v1103 = vunpack.c.l.b16 %v1067
    %v1104 = vunpack.c.l.b16 %v1068
    %v1105 = vunpack.c.l.b16 %v1069
    %v1106 = vunpack.c.l.b16 %v1070
    %v1107 = vunpack.c.l.b16 %v1071
    %v1108 = vunpack.c.l.b16 %v1072
    %v1109 = vunpack.c.l.b16 %v1073
    %v1110 = vunpack.c.l.b16 %v1074
    %v1111 = vunpack.c.l.b16 %v1075
    %v1112 = vunpack.c.l.b16 %v1076
    %v1113 = vunpack.c.l.b16 %v1077
    %v1114 = vunpack.c.l.b16 %v1078
    %v1115 = vunpack.c.l.b16 %v1079
    %v1116 = vunpack.c.l.b16 %v1080
    %v1117 = vunpack.c.l.b16 %v1081
    %v1118 = vpack.c.b16 %v1103, %v1102
    %v1119 = vpack.c.b16 %v1105, %v1104
    %v1120 = vpack.c.b16 %v1107, %v1106
    %v1121 = vpack.c.b16 %v1109, %v1108
    %v1122 = vpack.c.b16 %v1111, %v1110
    %v1123 = vpack.c.b16 %v1113, %v1112
    %v1124 = vpack.c.b16 %v1115, %v1114
    %v1125 = vpack.c.b16 %v1117, %v1116
    %1134 = vmatpush.bf16.msra.mxu0 %v1125
    %1135 = vmatpush.bf16.msra.mxu0 %v1124
    %1136 = vmatpush.bf16.msra.mxu0 %v1123
    %1137 = vmatpush.bf16.msra.mxu0 %v1122
    %1138 = vmatpush.bf16.msra.mxu0 %v1121
    %1139 = vmatpush.bf16.msra.mxu0 %v1120
    %1140 = vmatpush.bf16.msra.mxu0 %v1119
    %1141 = vmatpush.bf16.msra.mxu0 %v1118
    %1142 = vmatmul.bf16.gmra.mxu0 %v1058
    %v1143 = vpop.f32.mrf.mxu0
    %v1144 = vadd.f32 %v1084, %v1143
    %v1145 = vpop.f32.mrf.mxu0
    %v1146 = vadd.f32 %v1084, %v1145
    %1147 = vmatmul.bf16.gmra.mxu0 %v1059
    %v1148 = vpop.f32.mrf.mxu0
    %v1149 = vadd.f32 %v1084, %v1148
    %v1150 = vpop.f32.mrf.mxu0
    %v1151 = vadd.f32 %v1084, %v1150
    %1152 = vmatmul.bf16.gmra.mxu0 %v1060
    %v1153 = vpop.f32.mrf.mxu0
    %v1154 = vadd.f32 %v1084, %v1153
    %v1155 = vpop.f32.mrf.mxu0
    %v1156 = vadd.f32 %v1084, %v1155
    %1157 = vmatmul.bf16.gmra.mxu0 %v1061
    %v1158 = vpop.f32.mrf.mxu0
    %v1159 = vadd.f32 %v1084, %v1158
    %v1160 = vpop.f32.mrf.mxu0
    %v1161 = vadd.f32 %v1084, %v1160
    %1162 = vmatmul.bf16.gmra.mxu0 %v1062
    %v1163 = vpop.f32.mrf.mxu0
    %v1164 = vadd.f32 %v1084, %v1163
    %v1165 = vpop.f32.mrf.mxu0
    %v1166 = vadd.f32 %v1084, %v1165
    %1167 = vmatmul.bf16.gmra.mxu0 %v1063
    %v1168 = vpop.f32.mrf.mxu0
    %v1169 = vadd.f32 %v1084, %v1168
    %v1170 = vpop.f32.mrf.mxu0
    %v1171 = vadd.f32 %v1084, %v1170
    %1172 = vmatmul.bf16.gmra.mxu0 %v1064
    %v1173 = vpop.f32.mrf.mxu0
    %v1174 = vadd.f32 %v1084, %v1173
    %v1175 = vpop.f32.mrf.mxu0
    %v1176 = vadd.f32 %v1084, %v1175
    %1177 = vmatmul.bf16.gmra.mxu0 %v1065
    %v1178 = vpop.f32.mrf.mxu0
    %v1179 = vadd.f32 %v1084, %v1178
    %v1180 = vpop.f32.mrf.mxu0
    %v1181 = vadd.f32 %v1084, %v1180
    %1182 = vdwg.mxu0
    %v1183 = vmax.f32 %v1144, 0.0
    %v1184 = vmax.f32 %v1146, 0.0
    %v1185 = vmax.f32 %v1149, 0.0
    %v1186 = vmax.f32 %v1151, 0.0
    %v1187 = vmax.f32 %v1154, 0.0
    %v1188 = vmax.f32 %v1156, 0.0
    %v1189 = vmax.f32 %v1159, 0.0
    %v1190 = vmax.f32 %v1161, 0.0
    %v1191 = vmax.f32 %v1164, 0.0
    %v1192 = vmax.f32 %v1166, 0.0
    %v1193 = vmax.f32 %v1169, 0.0
    %v1194 = vmax.f32 %v1171, 0.0
    %v1195 = vmax.f32 %v1174, 0.0
    %v1196 = vmax.f32 %v1176, 0.0
    %v1197 = vmax.f32 %v1179, 0.0
    %v1198 = vmax.f32 %v1181, 0.0
    %v1199 = vpack.c.bf16 %v1184, %v1183
    %v1200 = vpack.c.bf16 %v1186, %v1185
    %v1201 = vpack.c.bf16 %v1188, %v1187
    %v1202 = vpack.c.bf16 %v1190, %v1189
    %v1203 = vpack.c.bf16 %v1192, %v1191
    %v1204 = vpack.c.bf16 %v1194, %v1193
    %v1205 = vpack.c.bf16 %v1196, %v1195
    %v1206 = vpack.c.bf16 %v1198, %v1197
    %v1207 = vld [vmem:[%s13] sm:$0xf]
    %v1208 = vld [vmem:[%s13 + $0x4] sm:$0xf]
    %v1209 = vld [vmem:[%s13 + $0x8] sm:$0xf]
    %v1210 = vld [vmem:[%s13 + $0xc] sm:$0xf]
    %v1211 = vld [vmem:[%s13 + $0x10] sm:$0xf]
    %v1212 = vld [vmem:[%s13 + $0x14] sm:$0xf]
    %v1213 = vld [vmem:[%s13 + $0x18] sm:$0xf]
    %v1214 = vld [vmem:[%s13 + $0x1c] sm:$0xf]
    %v1215 = vld [vmem:[%s13 + $0x20] sm:$0xf]
    %v1216 = vld [vmem:[%s13 + $0x24] sm:$0xf]
    %v1217 = vld [vmem:[%s13 + $0x28] sm:$0xf]
    %v1218 = vld [vmem:[%s13 + $0x2c] sm:$0xf]
    %v1219 = vld [vmem:[%s13 + $0x30] sm:$0xf]
    %v1220 = vld [vmem:[%s13 + $0x34] sm:$0xf]
    %v1221 = vld [vmem:[%s13 + $0x38] sm:$0xf]
    %v1222 = vld [vmem:[%s13 + $0x3c] sm:$0xf]
    %v1223 = vld [vmem:[%s14] sm:$0x1]
    %v1225 = vperm.slane %v1223, 0
    %v1243 = vunpack.c.l.b16 %v1207
    %v1244 = vunpack.c.l.b16 %v1208
    %v1245 = vunpack.c.l.b16 %v1209
    %v1246 = vunpack.c.l.b16 %v1210
    %v1247 = vunpack.c.l.b16 %v1211
    %v1248 = vunpack.c.l.b16 %v1212
    %v1249 = vunpack.c.l.b16 %v1213
    %v1250 = vunpack.c.l.b16 %v1214
    %v1251 = vunpack.c.l.b16 %v1215
    %v1252 = vunpack.c.l.b16 %v1216
    %v1253 = vunpack.c.l.b16 %v1217
    %v1254 = vunpack.c.l.b16 %v1218
    %v1255 = vunpack.c.l.b16 %v1219
    %v1256 = vunpack.c.l.b16 %v1220
    %v1257 = vunpack.c.l.b16 %v1221
    %v1258 = vunpack.c.l.b16 %v1222
    %v1259 = vpack.c.b16 %v1244, %v1243
    %v1260 = vpack.c.b16 %v1246, %v1245
    %v1261 = vpack.c.b16 %v1248, %v1247
    %v1262 = vpack.c.b16 %v1250, %v1249
    %v1263 = vpack.c.b16 %v1252, %v1251
    %v1264 = vpack.c.b16 %v1254, %v1253
    %v1265 = vpack.c.b16 %v1256, %v1255
    %v1266 = vpack.c.b16 %v1258, %v1257
    %1275 = vmatpush.bf16.msra.mxu0 %v1266
    %1276 = vmatpush.bf16.msra.mxu0 %v1265
    %1277 = vmatpush.bf16.msra.mxu0 %v1264
    %1278 = vmatpush.bf16.msra.mxu0 %v1263
    %1279 = vmatpush.bf16.msra.mxu0 %v1262
    %1280 = vmatpush.bf16.msra.mxu0 %v1261
    %1281 = vmatpush.bf16.msra.mxu0 %v1260
    %1282 = vmatpush.bf16.msra.mxu0 %v1259
    %1283 = vmatmul.bf16.gmra.mxu0 %v1199
    %v1284 = vpop.f32.mrf.mxu0
    %v1285 = vadd.f32 %v1225, %v1284
    %v1286 = vpop.f32.mrf.mxu0
    %v1287 = vadd.f32 %v1225, %v1286
    %1288 = vmatmul.bf16.gmra.mxu0 %v1200
    %v1289 = vpop.f32.mrf.mxu0
    %v1290 = vadd.f32 %v1225, %v1289
    %v1291 = vpop.f32.mrf.mxu0
    %v1292 = vadd.f32 %v1225, %v1291
    %1293 = vmatmul.bf16.gmra.mxu0 %v1201
    %v1294 = vpop.f32.mrf.mxu0
    %v1295 = vadd.f32 %v1225, %v1294
    %v1296 = vpop.f32.mrf.mxu0
    %v1297 = vadd.f32 %v1225, %v1296
    %1298 = vmatmul.bf16.gmra.mxu0 %v1202
    %v1299 = vpop.f32.mrf.mxu0
    %v1300 = vadd.f32 %v1225, %v1299
    %v1301 = vpop.f32.mrf.mxu0
    %v1302 = vadd.f32 %v1225, %v1301
    %1303 = vmatmul.bf16.gmra.mxu0 %v1203
    %v1304 = vpop.f32.mrf.mxu0
    %v1305 = vadd.f32 %v1225, %v1304
    %v1306 = vpop.f32.mrf.mxu0
    %v1307 = vadd.f32 %v1225, %v1306
    %1308 = vmatmul.bf16.gmra.mxu0 %v1204
    %v1309 = vpop.f32.mrf.mxu0
    %v1310 = vadd.f32 %v1225, %v1309
    %v1311 = vpop.f32.mrf.mxu0
    %v1312 = vadd.f32 %v1225, %v1311
    %1313 = vmatmul.bf16.gmra.mxu0 %v1205
    %v1314 = vpop.f32.mrf.mxu0
    %v1315 = vadd.f32 %v1225, %v1314
    %v1316 = vpop.f32.mrf.mxu0
    %v1317 = vadd.f32 %v1225, %v1316
    %1318 = vmatmul.bf16.gmra.mxu0 %v1206
    %v1319 = vpop.f32.mrf.mxu0
    %v1320 = vadd.f32 %v1225, %v1319
    %v1321 = vpop.f32.mrf.mxu0
    %v1322 = vadd.f32 %v1225, %v1321
    %1323 = vdwg.mxu0
    %v1324 = vmax.f32 %v1285, 0.0
    %v1325 = vmax.f32 %v1287, 0.0
    %v1326 = vmax.f32 %v1290, 0.0
    %v1327 = vmax.f32 %v1292, 0.0
    %v1328 = vmax.f32 %v1295, 0.0
    %v1329 = vmax.f32 %v1297, 0.0
    %v1330 = vmax.f32 %v1300, 0.0
    %v1331 = vmax.f32 %v1302, 0.0
    %v1332 = vmax.f32 %v1305, 0.0
    %v1333 = vmax.f32 %v1307, 0.0
    %v1334 = vmax.f32 %v1310, 0.0
    %v1335 = vmax.f32 %v1312, 0.0
    %v1336 = vmax.f32 %v1315, 0.0
    %v1337 = vmax.f32 %v1317, 0.0
    %v1338 = vmax.f32 %v1320, 0.0
    %v1339 = vmax.f32 %v1322, 0.0
    %v1340 = vpack.c.bf16 %v1324, %v1324
    %v1341 = vpack.c.bf16 %v1325, %v1325
    %v1342 = vpack.c.bf16 %v1326, %v1326
    %v1343 = vpack.c.bf16 %v1327, %v1327
    %v1344 = vpack.c.bf16 %v1328, %v1328
    %v1345 = vpack.c.bf16 %v1329, %v1329
    %v1346 = vpack.c.bf16 %v1330, %v1330
    %v1347 = vpack.c.bf16 %v1331, %v1331
    %v1348 = vpack.c.bf16 %v1332, %v1332
    %v1349 = vpack.c.bf16 %v1333, %v1333
    %v1350 = vpack.c.bf16 %v1334, %v1334
    %v1351 = vpack.c.bf16 %v1335, %v1335
    %v1352 = vpack.c.bf16 %v1336, %v1336
    %v1353 = vpack.c.bf16 %v1337, %v1337
    %v1354 = vpack.c.bf16 %v1338, %v1338
    %v1355 = vpack.c.bf16 %v1339, %v1339
    %v1356 = vunpack.c.l.bf16 %v1340
    %v1357 = vunpack.c.l.bf16 %v1341
    %v1358 = vunpack.c.l.bf16 %v1342
    %v1359 = vunpack.c.l.bf16 %v1343
    %v1360 = vunpack.c.l.bf16 %v1344
    %v1361 = vunpack.c.l.bf16 %v1345
    %v1362 = vunpack.c.l.bf16 %v1346
    %v1363 = vunpack.c.l.bf16 %v1347
    %v1364 = vunpack.c.l.bf16 %v1348
    %v1365 = vunpack.c.l.bf16 %v1349
    %v1366 = vunpack.c.l.bf16 %v1350
    %v1367 = vunpack.c.l.bf16 %v1351
    %v1368 = vunpack.c.l.bf16 %v1352
    %v1369 = vunpack.c.l.bf16 %v1353
    %v1370 = vunpack.c.l.bf16 %v1354
    %v1371 = vunpack.c.l.bf16 %v1355
    %v1372 = vsel %vm202, 1, 0
    %v1373 = vsel %vm203, 1, 0
    %v1374 = vsel %vm204, 1, 0
    %v1375 = vsel %vm205, 1, 0
    %v1376 = vsel %vm206, 1, 0
    %v1377 = vsel %vm207, 1, 0
    %v1378 = vsel %vm208, 1, 0
    %v1379 = vsel %vm209, 1, 0
    %v1380 = vsel %vm210, 1, 0
    %v1381 = vsel %vm211, 1, 0
    %v1382 = vsel %vm212, 1, 0
    %v1383 = vsel %vm213, 1, 0
    %v1384 = vsel %vm214, 1, 0
    %v1385 = vsel %vm215, 1, 0
    %v1386 = vsel %vm216, 1, 0
    %v1387 = vsel %vm217, 1, 0
    %vm1388 = vcmp.eq.s32.totalorder %v1372, 1
    %vm1389 = vcmp.eq.s32.totalorder %v1373, 1
    %vm1390 = vcmp.eq.s32.totalorder %v1374, 1
    %vm1391 = vcmp.eq.s32.totalorder %v1375, 1
    %vm1392 = vcmp.eq.s32.totalorder %v1376, 1
    %vm1393 = vcmp.eq.s32.totalorder %v1377, 1
    %vm1394 = vcmp.eq.s32.totalorder %v1378, 1
    %vm1395 = vcmp.eq.s32.totalorder %v1379, 1
    %vm1396 = vcmp.eq.s32.totalorder %v1380, 1
    %vm1397 = vcmp.eq.s32.totalorder %v1381, 1
    %vm1398 = vcmp.eq.s32.totalorder %v1382, 1
    %vm1399 = vcmp.eq.s32.totalorder %v1383, 1
    %vm1400 = vcmp.eq.s32.totalorder %v1384, 1
    %vm1401 = vcmp.eq.s32.totalorder %v1385, 1
    %vm1402 = vcmp.eq.s32.totalorder %v1386, 1
    %vm1403 = vcmp.eq.s32.totalorder %v1387, 1
    %v1404 = vsel %vm1388, %v1356, 0.0
    %v1405 = vsel %vm1389, %v1357, 0.0
    %v1406 = vsel %vm1390, %v1358, 0.0
    %v1407 = vsel %vm1391, %v1359, 0.0
    %v1408 = vsel %vm1392, %v1360, 0.0
    %v1409 = vsel %vm1393, %v1361, 0.0
    %v1410 = vsel %vm1394, %v1362, 0.0
    %v1411 = vsel %vm1395, %v1363, 0.0
    %v1412 = vsel %vm1396, %v1364, 0.0
    %v1413 = vsel %vm1397, %v1365, 0.0
    %v1414 = vsel %vm1398, %v1366, 0.0
    %v1415 = vsel %vm1399, %v1367, 0.0
    %v1416 = vsel %vm1400, %v1368, 0.0
    %v1417 = vsel %vm1401, %v1369, 0.0
    %v1418 = vsel %vm1402, %v1370, 0.0
    %v1419 = vsel %vm1403, %v1371, 0.0
    %v1420 = vadd.f32 %v1404, %v1405
    %v1421 = vadd.f32 %v1420, %v1406
    %v1422 = vadd.f32 %v1421, %v1407
    %v1423 = vadd.f32 %v1422, %v1408
    %v1424 = vadd.f32 %v1423, %v1409
    %v1425 = vadd.f32 %v1424, %v1410
    %v1426 = vadd.f32 %v1425, %v1411
    %v1427 = vadd.f32 %v1426, %v1412
    %v1428 = vadd.f32 %v1427, %v1413
    %v1429 = vadd.f32 %v1428, %v1414
    %v1430 = vadd.f32 %v1429, %v1415
    %v1431 = vadd.f32 %v1430, %v1416
    %v1432 = vadd.f32 %v1431, %v1417
    %v1433 = vadd.f32 %v1432, %v1418
    %v1434 = vadd.f32 %v1433, %v1419
    %v1435 = vrot.slane %v1434, 4
    %v1436 = vadd.f32 %v1434, %v1435
    %v1437 = vrot.slane %v1436, 2
    %v1438 = vadd.f32 %v1436, %v1437
    %v1439 = vrot.slane %v1438, 1
    %v1440 = vadd.f32 %v1438, %v1439
    %v1441 = vmul.f32 %v1440, 0.0625
    %v1442 = vpack.c.bf16 %v1441, %v1441
    %v1443 = vld [vmem:[%s15] sm:$0xf]
    %v1444 = vld [vmem:[%s15 + $0x4] sm:$0xf]
    %v1445 = vld [vmem:[%s15 + $0x8] sm:$0xf]
    %v1446 = vld [vmem:[%s15 + $0xc] sm:$0xf]
    %v1447 = vld [vmem:[%s15 + $0x10] sm:$0xf]
    %v1448 = vld [vmem:[%s15 + $0x14] sm:$0xf]
    %v1449 = vld [vmem:[%s15 + $0x18] sm:$0xf]
    %v1450 = vld [vmem:[%s15 + $0x1c] sm:$0xf]
    %v1451 = vld [vmem:[%s15 + $0x20] sm:$0xf]
    %v1452 = vld [vmem:[%s15 + $0x24] sm:$0xf]
    %v1453 = vld [vmem:[%s15 + $0x28] sm:$0xf]
    %v1454 = vld [vmem:[%s15 + $0x2c] sm:$0xf]
    %v1455 = vld [vmem:[%s15 + $0x30] sm:$0xf]
    %v1456 = vld [vmem:[%s15 + $0x34] sm:$0xf]
    %v1457 = vld [vmem:[%s15 + $0x38] sm:$0xf]
    %v1458 = vld [vmem:[%s15 + $0x3c] sm:$0xf]
    %v1459 = vld [vmem:[%s16] sm:$0x1]
    %v1476 = vunpack.c.l.b16 %v1443
    %v1477 = vunpack.c.l.b16 %v1444
    %v1478 = vunpack.c.l.b16 %v1445
    %v1479 = vunpack.c.l.b16 %v1446
    %v1480 = vunpack.c.l.b16 %v1447
    %v1481 = vunpack.c.l.b16 %v1448
    %v1482 = vunpack.c.l.b16 %v1449
    %v1483 = vunpack.c.l.b16 %v1450
    %v1484 = vunpack.c.l.b16 %v1451
    %v1485 = vunpack.c.l.b16 %v1452
    %v1486 = vunpack.c.l.b16 %v1453
    %v1487 = vunpack.c.l.b16 %v1454
    %v1488 = vunpack.c.l.b16 %v1455
    %v1489 = vunpack.c.l.b16 %v1456
    %v1490 = vunpack.c.l.b16 %v1457
    %v1491 = vunpack.c.l.b16 %v1458
    %v1492 = vpack.c.b16 %v1477, %v1476
    %v1493 = vpack.c.b16 %v1479, %v1478
    %v1494 = vpack.c.b16 %v1481, %v1480
    %v1495 = vpack.c.b16 %v1483, %v1482
    %v1496 = vpack.c.b16 %v1485, %v1484
    %v1497 = vpack.c.b16 %v1487, %v1486
    %v1498 = vpack.c.b16 %v1489, %v1488
    %v1499 = vpack.c.b16 %v1491, %v1490
    %1508 = vmatpush.bf16.msra.mxu0 %v1499
    %1509 = vmatpush.bf16.msra.mxu0 %v1498
    %1510 = vmatpush.bf16.msra.mxu0 %v1497
    %1511 = vmatpush.bf16.msra.mxu0 %v1496
    %1512 = vmatpush.bf16.msra.mxu0 %v1495
    %1513 = vmatpush.bf16.msra.mxu0 %v1494
    %1514 = vmatpush.bf16.msra.mxu0 %v1493
    %1515 = vmatpush.bf16.msra.mxu0 %v1492
    %1516 = vmatmul.bf16.gmra.mxu0 %v1442
    %v1517 = vpop.f32.mrf.mxu0
    %v1518 = vadd.f32 %v1459, %v1517
    %v1519 = vpop.f32.mrf.mxu0
    %1520 = vdwg.mxu0
    %v1521 = vmax.f32 %v1518, 0.0
    %v1522 = vpack.c.bf16 %v1521, %v1521
    %v1523 = vld [vmem:[%s17] sm:$0xf]
    %v1524 = vld [vmem:[%s17 + $0x4] sm:$0xf]
    %v1525 = vld [vmem:[%s17 + $0x8] sm:$0xf]
    %v1526 = vld [vmem:[%s17 + $0xc] sm:$0xf]
    %v1527 = vld [vmem:[%s17 + $0x10] sm:$0xf]
    %v1528 = vld [vmem:[%s17 + $0x14] sm:$0xf]
    %v1529 = vld [vmem:[%s17 + $0x18] sm:$0xf]
    %v1530 = vld [vmem:[%s17 + $0x1c] sm:$0xf]
    %v1531 = vld [vmem:[%s17 + $0x20] sm:$0xf]
    %v1532 = vld [vmem:[%s17 + $0x24] sm:$0xf]
    %v1533 = vld [vmem:[%s17 + $0x28] sm:$0xf]
    %v1534 = vld [vmem:[%s17 + $0x2c] sm:$0xf]
    %v1535 = vld [vmem:[%s17 + $0x30] sm:$0xf]
    %v1536 = vld [vmem:[%s17 + $0x34] sm:$0xf]
    %v1537 = vld [vmem:[%s17 + $0x38] sm:$0xf]
    %v1538 = vld [vmem:[%s17 + $0x3c] sm:$0xf]
    %v1539 = vld [vmem:[%s18] sm:$0x1]
    %v1556 = vunpack.c.l.b16 %v1523
    %v1557 = vunpack.c.l.b16 %v1524
    %v1558 = vunpack.c.l.b16 %v1525
    %v1559 = vunpack.c.l.b16 %v1526
    %v1560 = vunpack.c.l.b16 %v1527
    %v1561 = vunpack.c.l.b16 %v1528
    %v1562 = vunpack.c.l.b16 %v1529
    %v1563 = vunpack.c.l.b16 %v1530
    %v1564 = vunpack.c.l.b16 %v1531
    %v1565 = vunpack.c.l.b16 %v1532
    %v1566 = vunpack.c.l.b16 %v1533
    %v1567 = vunpack.c.l.b16 %v1534
    %v1568 = vunpack.c.l.b16 %v1535
    %v1569 = vunpack.c.l.b16 %v1536
    %v1570 = vunpack.c.l.b16 %v1537
    %v1571 = vunpack.c.l.b16 %v1538
    %v1572 = vpack.c.b16 %v1557, %v1556
    %v1573 = vpack.c.b16 %v1559, %v1558
    %v1574 = vpack.c.b16 %v1561, %v1560
    %v1575 = vpack.c.b16 %v1563, %v1562
    %v1576 = vpack.c.b16 %v1565, %v1564
    %v1577 = vpack.c.b16 %v1567, %v1566
    %v1578 = vpack.c.b16 %v1569, %v1568
    %v1579 = vpack.c.b16 %v1571, %v1570
    %1588 = vmatpush.bf16.msra.mxu0 %v1579
    %1589 = vmatpush.bf16.msra.mxu0 %v1578
    %1590 = vmatpush.bf16.msra.mxu0 %v1577
    %1591 = vmatpush.bf16.msra.mxu0 %v1576
    %1592 = vmatpush.bf16.msra.mxu0 %v1575
    %1593 = vmatpush.bf16.msra.mxu0 %v1574
    %1594 = vmatpush.bf16.msra.mxu0 %v1573
    %1595 = vmatpush.bf16.msra.mxu0 %v1572
    %1596 = vmatmul.bf16.gmra.mxu0 %v1522
    %v1597 = vpop.f32.mrf.mxu0
    %v1598 = vadd.f32 %v1539, %v1597
    %v1599 = vpop.f32.mrf.mxu0
    %1600 = vdwg.mxu0
    %1601 = vst [vmem:[#allocation2] sm:$0x1] %v1598
    // Predicated region
    $region78: #{gin_3l_forward.1} parent=1 // pred_check
      _
    $region79: #{gin_3l_forward.1} parent=1 // pred_check_branch
      %1603 = sbr.rel (0) target = $region81
    $region80: #{gin_3l_forward.1} parent=1 // pred_region
      %1605 = vsyncadd [#allocation3], 0
      %s1607 = sshll.u32 [#allocation2], 4
      %s1608 = int_to_ptr.vmem [resolvable:$true] %s1607
      %s1609 = sshll.u32 %s19, 4
      %s1610 = int_to_ptr.hbm [resolvable:$true] %s1609
      %1612 = dma.vmem_to_hbm [thread:$0]  %s1608, 16, %s1610, [#allocation3]
    $region81: #{gin_3l_forward.1} parent=1 // pred_fallthru
      _
    // Predicated region
    $region82: #{gin_3l_forward.1} parent=1 // pred_check
      _
    $region83: #{gin_3l_forward.1} parent=1 // pred_check_branch
      %1614 = sbr.rel (0) target = $region85
    $region84: #{gin_3l_forward.1} parent=1 // pred_region
      %1616 = dma.done [#allocation3], 16
    $region85: #{gin_3l_forward.1} parent=1 // pred_fallthru
      _
    %1617 = vsyncpa [#allocation3], 1

</llo_original>
